<compile_context>
chip_gen: v7x
topology: tpu7x:2x2x1
jax: 0.10.0
libtpu: 0.0.40
codegen_flags: <defaults>
</compile_context>

<pallas_src>
import functools

import jax
import jax.numpy as jnp
import numpy as np
from jax.experimental import pallas as pl
from jax.experimental.pallas import tpu as pltpu


# -----------------------------------------------------------------------------
# Pallas kernel
# -----------------------------------------------------------------------------
def _wn_kernel(x_ref, mask_ref, g_ref,
               gate_wa_ref, gate_wb_ref,
               bias_a_ref, bias_b_ref,
               rs_wr_ref, rs_ws_ref,
               rs_br_ref, rs_bs_ref,
               out_ref,
               x_pad_ref,
               *, hidden_channels, kernel_size, dilation_rate, n_layers, left_pad):
    H = hidden_channels
    k = kernel_size
    T = x_ref.shape[1]

    mask = mask_ref[0]                       # (T, 1) f32
    g = g_ref[0]                             # (T, Gin) bf16

    # Residual carry lives in a single f32 padded VMEM scratch.  Zero the pad
    # regions once; the center (sublane-aligned) is (re)written every layer.
    x_pad_ref[...] = jnp.zeros_like(x_pad_ref)
    x_pad_ref[left_pad:left_pad + T, :] = x_ref[0].astype(jnp.float32)

    out_ref[0] = jnp.zeros((T, H), dtype=jnp.float32)

    for i in range(n_layers):                # statically unrolled (n_layers small)
        d = dilation_rate ** i
        pad = d * (k - 1) // 2
        base = left_pad - pad                # static Python int per layer

        # Gather the k dilated taps plus the conditioning input into one
        # (T, k*H + Gin) bf16 operand so the dilated conv AND the cond projection
        # are a single MXU matmul per gate half.
        operand = jnp.concatenate(
            [x_pad_ref[base + j * d: base + j * d + T, :].astype(jnp.bfloat16)
             for j in range(k)] + [g],
            axis=1)                                              # (T, k*H + Gin)

        a = jnp.dot(operand, gate_wa_ref[i], preferred_element_type=jnp.float32)
        b = jnp.dot(operand, gate_wb_ref[i], preferred_element_type=jnp.float32)
        a = a + bias_a_ref[i:i + 1, :]          # biases merge conv_b + cond_b
        b = b + bias_b_ref[i:i + 1, :]

        # fused_add_tanh_sigmoid_multiply
        acts = (jnp.tanh(a) * jax.nn.sigmoid(b)).astype(jnp.bfloat16)   # (T, H)
        # TODO(synk): dropout is identity here (p_dropout=0 / eval mode).

        # res / skip 1x1 convs (pre-split weights, lane-aligned outputs).
        skip = jnp.dot(acts, rs_ws_ref[i], preferred_element_type=jnp.float32)
        out_ref[0] = out_ref[0] + skip + rs_bs_ref[i:i + 1, :]

        if i < n_layers - 1:
            res = jnp.dot(acts, rs_wr_ref[i], preferred_element_type=jnp.float32)
            res = res + rs_br_ref[i:i + 1, :]
            x_pad_ref[left_pad:left_pad + T, :] = (
                x_pad_ref[left_pad:left_pad + T, :] + res) * mask

    out_ref[0] = out_ref[0] * mask


# -----------------------------------------------------------------------------
# Wrapper (plain-JAX glue: layout transposes + pallas_call)
# -----------------------------------------------------------------------------
def _nbytes(shape, dtype):
    return int(np.prod(shape)) * jnp.dtype(dtype).itemsize


def _round_up(v, m):
    return ((v + m - 1) // m) * m


def wn_forward(x, x_mask, g, kparams, *, hidden_channels, kernel_size,
               dilation_rate, n_layers):
    """x: (B, H, T), x_mask: (B, 1, T), g: (B, Gin, T)  (PyTorch NCW)."""
    (gate_wa, gate_wb, bias_a, bias_b, rs_wr, rs_ws, rs_br, rs_bs) = kparams
    B, H, T = x.shape
    Gin = g.shape[1]
    L, k = n_layers, kernel_size
    max_pad = (dilation_rate ** (n_layers - 1)) * (kernel_size - 1) // 2
    left_pad = _round_up(max_pad, 8) if max_pad > 0 else 0   # sublane-aligned center
    Tp = left_pad + T + max_pad
    KG = k * H + Gin

    xt = jnp.transpose(x, (0, 2, 1)).astype(jnp.bfloat16)        # (B, T, H)
    mt = jnp.transpose(x_mask, (0, 2, 1)).astype(jnp.float32)    # (B, T, 1)
    gt = jnp.transpose(g, (0, 2, 1)).astype(jnp.bfloat16)        # (B, T, Gin)

    kernel = functools.partial(
        _wn_kernel,
        hidden_channels=H, kernel_size=k, dilation_rate=dilation_rate,
        n_layers=L, left_pad=left_pad)

    weights = (gate_wa, gate_wb, bias_a, bias_b, rs_wr, rs_ws, rs_br, rs_bs)

    # ---- VMEM budget & cost estimate (shapes are static Python ints) --------
    weight_bytes = sum(_nbytes(w.shape, w.dtype) for w in weights)
    block_bytes = (_nbytes((T, H), jnp.bfloat16) + _nbytes((T, 1), jnp.float32)
                   + _nbytes((T, Gin), jnp.bfloat16) + _nbytes((T, H), jnp.float32))
    scratch_bytes = _nbytes((Tp, H), jnp.float32)
    work_bytes = _nbytes((T, KG), jnp.bfloat16) + 8 * _nbytes((T, H), jnp.float32)
    vmem_limit = int(min(100 << 20,
                         max(32 << 20,
                             weight_bytes + 2 * block_bytes + scratch_bytes
                             + work_bytes + (4 << 20))))

    flops = B * (2 * T * KG * H * 2 * L              # fused gate matmuls (a+b halves)
                 + 2 * T * H * H * (2 * (L - 1) + 1))  # res+skip 1x1 (last: skip only)
    transcendentals = B * 2 * T * H * L
    bytes_accessed = B * block_bytes + weight_bytes

    out = pl.pallas_call(
        kernel,
        out_shape=jax.ShapeDtypeStruct((B, T, H), jnp.float32),
        grid_spec=pltpu.PrefetchScalarGridSpec(
            num_scalar_prefetch=0,
            grid=(B,),
            in_specs=[
                pl.BlockSpec((1, T, H), lambda b: (b, 0, 0)),         # x
                pl.BlockSpec((1, T, 1), lambda b: (b, 0, 0)),         # mask
                pl.BlockSpec((1, T, Gin), lambda b: (b, 0, 0)),       # g
                pl.BlockSpec((L, KG, H), lambda b: (0, 0, 0)),        # gate_wa
                pl.BlockSpec((L, KG, H), lambda b: (0, 0, 0)),        # gate_wb
                pl.BlockSpec((L, H), lambda b: (0, 0)),               # bias_a
                pl.BlockSpec((L, H), lambda b: (0, 0)),               # bias_b
                pl.BlockSpec((L, H, H), lambda b: (0, 0, 0)),         # rs_wr
                pl.BlockSpec((L, H, H), lambda b: (0, 0, 0)),         # rs_ws
                pl.BlockSpec((L, H), lambda b: (0, 0)),               # rs_br
                pl.BlockSpec((L, H), lambda b: (0, 0)),               # rs_bs
            ],
            out_specs=pl.BlockSpec((1, T, H), lambda b: (b, 0, 0)),
            scratch_shapes=[pltpu.VMEM((Tp, H), jnp.float32)],
        ),
        compiler_params=pltpu.CompilerParams(
            dimension_semantics=("parallel",),
            vmem_limit_bytes=vmem_limit),
        cost_estimate=pl.CostEstimate(flops=flops,
                                      transcendentals=transcendentals,
                                      bytes_accessed=bytes_accessed),
    )(xt, mt, gt, *weights)

    return jnp.transpose(out, (0, 2, 1))                          # back to (B, H, T)


# -----------------------------------------------------------------------------
# Deterministic parameter construction (weight-normalized conv weights)
# -----------------------------------------------------------------------------
def _weight_norm_conv(key, out_ch, in_ch, k):
    """Return a Conv1d weight (out_ch, in_ch, k) built as g * v / ||v|| (dim=0)."""
    kv, kg, kb = jax.random.split(key, 3)
    v = jax.random.normal(kv, (out_ch, in_ch, k), dtype=jnp.float32) * 0.2
    gsc = jnp.abs(jax.random.normal(kg, (out_ch, 1, 1), dtype=jnp.float32)) + 0.5
    norm = jnp.sqrt(jnp.sum(v * v, axis=(1, 2), keepdims=True)) + 1e-8
    w = gsc * v / norm
    b = jax.random.normal(kb, (out_ch,), dtype=jnp.float32) * 0.1
    return w, b


def make_wn_params(key, hidden_channels, kernel_size, dilation_rate, n_layers,
                   gin_channels):
    H, k, L = hidden_channels, kernel_size, n_layers
    keys = jax.random.split(key, 1 + 2 * L)

    # torch-layout parameters (for the pure-JAX reference)
    cond_w_t, cond_b_t = _weight_norm_conv(keys[0], 2 * H * L, gin_channels, 1)
    in_ws, in_bs, rs_ws_t, rs_bs_t = [], [], [], []
    for i in range(L):
        w, b = _weight_norm_conv(keys[1 + i], 2 * H, H, k)
        in_ws.append(w); in_bs.append(b)
        c_out = 2 * H if i < L - 1 else H
        w, b = _weight_norm_conv(keys[1 + L + i], c_out, H, 1)
        rs_ws_t.append(w); rs_bs_t.append(b)
    torch_params = (cond_w_t, cond_b_t, in_ws, in_bs, rs_ws_t, rs_bs_t)

    # ---- kernel-layout parameters (channels-last, split halves, bf16 weights,
    #      conditioning rows fused into the gate matmul weights) ----------------
    bf16 = jnp.bfloat16
    cond_w_cl = jnp.transpose(cond_w_t[:, :, 0], (1, 0))          # (Gin, 2HL)

    gate_wa_l, gate_wb_l, bias_a_l, bias_b_l = [], [], [], []
    for i in range(L):
        # fused-tap conv weight: W[j*H + c_in, o] = w[o, c_in, j]
        w_full = jnp.transpose(in_ws[i], (2, 1, 0)).reshape(k * H, 2 * H)
        cond_wa_i = cond_w_cl[:, i * 2 * H: i * 2 * H + H]        # (Gin, H)
        cond_wb_i = cond_w_cl[:, i * 2 * H + H: (i + 1) * 2 * H]  # (Gin, H)
        gate_wa_l.append(jnp.concatenate([w_full[:, :H], cond_wa_i], axis=0))
        gate_wb_l.append(jnp.concatenate([w_full[:, H:], cond_wb_i], axis=0))
        bias_a_l.append(in_bs[i][:H] + cond_b_t[i * 2 * H: i * 2 * H + H])
        bias_b_l.append(in_bs[i][H:] + cond_b_t[i * 2 * H + H: (i + 1) * 2 * H])
    gate_wa = jnp.stack(gate_wa_l).astype(bf16)                    # (L, kH+Gin, H)
    gate_wb = jnp.stack(gate_wb_l).astype(bf16)                    # (L, kH+Gin, H)
    bias_a = jnp.stack(bias_a_l).astype(jnp.float32)               # (L, H)
    bias_b = jnp.stack(bias_b_l).astype(jnp.float32)               # (L, H)

    rs_wr_l, rs_ws_l, rs_br_l, rs_bs_l = [], [], [], []
    for i in range(L):
        w_cl = jnp.transpose(rs_ws_t[i][:, :, 0], (1, 0))          # (H, c_out)
        b = rs_bs_t[i]
        if i < L - 1:
            rs_wr_l.append(w_cl[:, :H]); rs_ws_l.append(w_cl[:, H:])
            rs_br_l.append(b[:H]);       rs_bs_l.append(b[H:])
        else:  # last layer: everything goes to the skip/output path
            rs_wr_l.append(jnp.zeros((H, H), jnp.float32))
            rs_ws_l.append(w_cl)
            rs_br_l.append(jnp.zeros((H,), jnp.float32))
            rs_bs_l.append(b)
    rs_wr = jnp.stack(rs_wr_l).astype(bf16)                        # (L, H, H)
    rs_ws = jnp.stack(rs_ws_l).astype(bf16)                        # (L, H, H)
    rs_br = jnp.stack(rs_br_l).astype(jnp.float32)                 # (L, H)
    rs_bs = jnp.stack(rs_bs_l).astype(jnp.float32)                 # (L, H)

    kernel_params = (gate_wa, gate_wb, bias_a, bias_b, rs_wr, rs_ws, rs_br, rs_bs)
    return torch_params, kernel_params


# -----------------------------------------------------------------------------
# Pure-JAX reference (mirrors the PyTorch forward, NCW layout) for validation
# -----------------------------------------------------------------------------
def _conv1d_ncw(x, w, b, dilation, padding):
    out = jax.lax.conv_general_dilated(
        x, w, window_strides=(1,), padding=[(padding, padding)],
        rhs_dilation=(dilation,), dimension_numbers=("NCH", "OIH", "NCH"))
    return out + b[None, :, None]


def wn_reference(x, x_mask, g, torch_params, *, hidden_channels, kernel_size,
                 dilation_rate, n_layers):
    H, k, L = hidden_channels, kernel_size, n_layers
    cond_w, cond_b, in_ws, in_bs, rs_ws, rs_bs = torch_params
    output = jnp.zeros_like(x)
    g_c = _conv1d_ncw(g, cond_w, cond_b, 1, 0)
    for i in range(L):
        d = dilation_rate ** i
        p = (k * d - d) // 2
        x_in = _conv1d_ncw(x, in_ws[i], in_bs[i], d, p)
        g_l = g_c[:, i * 2 * H:(i + 1) * 2 * H, :]
        in_act = x_in + g_l
        acts = jnp.tanh(in_act[:, :H]) * jax.nn.sigmoid(in_act[:, H:])
        rs = _conv1d_ncw(acts, rs_ws[i], rs_bs[i], 1, 0)
        if i < L - 1:
            x = (x + rs[:, :H]) * x_mask
            output = output + rs[:, H:]
        else:
            output = output + rs
    return output * x_mask


# -----------------------------------------------------------------------------
if __name__ == "__main__":
    B, H, T = 2, 32, 16
    kernel_size, dilation_rate, n_layers, gin_channels = 3, 2, 3, 16

    key = jax.random.PRNGKey(0)
    kx, kg, kp = jax.random.split(key, 3)

    x = jax.random.normal(kx, (B, H, T), dtype=jnp.float32)           # (B, C, T)
    g = jax.random.normal(kg, (B, gin_channels, T), dtype=jnp.float32)
    lengths = jnp.array([T, T - 5])
    x_mask = (jnp.arange(T)[None, None, :] < lengths[:, None, None]).astype(jnp.float32)

    torch_params, kernel_params = make_wn_params(
        kp, H, kernel_size, dilation_rate, n_layers, gin_channels)

    out = wn_forward(x, x_mask, g, kernel_params,
                     hidden_channels=H, kernel_size=kernel_size,
                     dilation_rate=dilation_rate, n_layers=n_layers)
    out = jax.block_until_ready(out)

    ref = wn_reference(x, x_mask, g, torch_params,
                       hidden_channels=H, kernel_size=kernel_size,
                       dilation_rate=dilation_rate, n_layers=n_layers)

    # bf16 matmul operands with f32 accumulation -> looser tolerance than fp32.
    np.testing.assert_allclose(np.asarray(out), np.asarray(ref),
                               rtol=5e-2, atol=5e-2)
    print("KERNEL_OK")
</pallas_src>

<mosaic_0001>
module attributes {stable_mosaic.version = 11 : i64} {
  func.func @_wn_kernel(%arg0: i32, %arg1: memref<1x16x32xbf16, #tpu.memory_space<vmem>>, %arg2: memref<1x16x1xf32, #tpu.memory_space<vmem>>, %arg3: memref<1x16x16xbf16, #tpu.memory_space<vmem>>, %arg4: memref<3x112x32xbf16, #tpu.memory_space<vmem>>, %arg5: memref<3x112x32xbf16, #tpu.memory_space<vmem>>, %arg6: memref<3x32xf32, #tpu.memory_space<vmem>>, %arg7: memref<3x32xf32, #tpu.memory_space<vmem>>, %arg8: memref<3x32x32xbf16, #tpu.memory_space<vmem>>, %arg9: memref<3x32x32xbf16, #tpu.memory_space<vmem>>, %arg10: memref<3x32xf32, #tpu.memory_space<vmem>>, %arg11: memref<3x32xf32, #tpu.memory_space<vmem>>, %arg12: memref<1x16x32xf32, #tpu.memory_space<vmem>>, %arg13: memref<28x32xf32, #tpu.memory_space<vmem>>) attributes {dimension_semantics = [#tpu.dimension_semantics<parallel>], iteration_bounds = array<i64: 2>, scalar_prefetch = 0 : i64, scratch_operands = 1 : i64, tpu.core_type = #tpu.core_type<tc>, window_params = [{transform_indices = @transform_0, window_bounds = array<i64: 1, 16, 32>}, {transform_indices = @transform_1, window_bounds = array<i64: 1, 16, 1>}, {transform_indices = @transform_2, window_bounds = array<i64: 1, 16, 16>}, {pipeline_mode = #tpu.pipeline_mode<synchronous>, transform_indices = @transform_3, window_bounds = array<i64: 3, 112, 32>}, {pipeline_mode = #tpu.pipeline_mode<synchronous>, transform_indices = @transform_4, window_bounds = array<i64: 3, 112, 32>}, {pipeline_mode = #tpu.pipeline_mode<synchronous>, transform_indices = @transform_5, window_bounds = array<i64: 3, 32>}, {pipeline_mode = #tpu.pipeline_mode<synchronous>, transform_indices = @transform_6, window_bounds = array<i64: 3, 32>}, {pipeline_mode = #tpu.pipeline_mode<synchronous>, transform_indices = @transform_7, window_bounds = array<i64: 3, 32, 32>}, {pipeline_mode = #tpu.pipeline_mode<synchronous>, transform_indices = @transform_8, window_bounds = array<i64: 3, 32, 32>}, {pipeline_mode = #tpu.pipeline_mode<synchronous>, transform_indices = @transform_9, window_bounds = array<i64: 3, 32>}, {pipeline_mode = #tpu.pipeline_mode<synchronous>, transform_indices = @transform_10, window_bounds = array<i64: 3, 32>}, {transform_indices = @transform_11, window_bounds = array<i64: 1, 16, 32>}]} {
    %c0 = arith.constant 0 : index
    %c0_0 = arith.constant 0 : index
    %c0_1 = arith.constant 0 : index
    %0 = vector.load %arg2[%c0, %c0_0, %c0_1] : memref<1x16x1xf32, #tpu.memory_space<vmem>>, vector<1x16x1xf32>
    %1 = vector.shape_cast %0 : vector<1x16x1xf32> to vector<16x1xf32>
    %c0_2 = arith.constant 0 : index
    %c0_3 = arith.constant 0 : index
    %c0_4 = arith.constant 0 : index
    %2 = vector.load %arg3[%c0_2, %c0_3, %c0_4] : memref<1x16x16xbf16, #tpu.memory_space<vmem>>, vector<1x16x16xbf16>
    %3 = vector.shape_cast %2 : vector<1x16x16xbf16> to vector<16x16xbf16>
    %cst = arith.constant 0.000000e+00 : f32
    %4 = vector.broadcast %cst : f32 to vector<28x32xf32>
    %c0_5 = arith.constant 0 : index
    %c0_6 = arith.constant 0 : index
    %5 = vector.load %arg13[%c0_5, %c0_6] : memref<28x32xf32, #tpu.memory_space<vmem>>, vector<28x32xf32>
    tpu.vector_store %arg13[%c0_5, %c0_6], %4 {strides = array<i32>} : memref<28x32xf32, #tpu.memory_space<vmem>>, vector<28x32xf32>,
    %c0_7 = arith.constant 0 : index
    %c0_8 = arith.constant 0 : index
    %c0_9 = arith.constant 0 : index
    %6 = vector.load %arg1[%c0_7, %c0_8, %c0_9] : memref<1x16x32xbf16, #tpu.memory_space<vmem>>, vector<1x16x32xbf16>
    %7 = vector.shape_cast %6 : vector<1x16x32xbf16> to vector<16x32xbf16>
    %8 = arith.extf %7 : vector<16x32xbf16> to vector<16x32xf32>
    %c8 = arith.constant 8 : index
    %c0_10 = arith.constant 0 : index
    %9 = vector.load %arg13[%c8, %c0_10] : memref<28x32xf32, #tpu.memory_space<vmem>>, vector<16x32xf32>
    tpu.vector_store %arg13[%c8, %c0_10], %8 {strides = array<i32>} : memref<28x32xf32, #tpu.memory_space<vmem>>, vector<16x32xf32>,
    %cst_11 = arith.constant 0.000000e+00 : f32
    %10 = vector.broadcast %cst_11 : f32 to vector<16x32xf32>
    %c0_12 = arith.constant 0 : index
    %c0_13 = arith.constant 0 : index
    %c0_14 = arith.constant 0 : index
    %11 = vector.load %arg12[%c0_12, %c0_13, %c0_14] : memref<1x16x32xf32, #tpu.memory_space<vmem>>, vector<1x16x32xf32>
    %12 = vector.shape_cast %11 : vector<1x16x32xf32> to vector<16x32xf32>
    %13 = vector.shape_cast %10 : vector<16x32xf32> to vector<1x16x32xf32>
    tpu.vector_store %arg12[%c0_12, %c0_13, %c0_14], %13 {strides = array<i32>} : memref<1x16x32xf32, #tpu.memory_space<vmem>>, vector<1x16x32xf32>,
    %c7 = arith.constant 7 : index
    %c0_15 = arith.constant 0 : index
    %14 = vector.load %arg13[%c7, %c0_15] : memref<28x32xf32, #tpu.memory_space<vmem>>, vector<16x32xf32>
    %15 = arith.truncf %14 : vector<16x32xf32> to vector<16x32xbf16>
    %c8_16 = arith.constant 8 : index
    %c0_17 = arith.constant 0 : index
    %16 = vector.load %arg13[%c8_16, %c0_17] : memref<28x32xf32, #tpu.memory_space<vmem>>, vector<16x32xf32>
    %17 = arith.truncf %16 : vector<16x32xf32> to vector<16x32xbf16>
    %c9 = arith.constant 9 : index
    %c0_18 = arith.constant 0 : index
    %18 = vector.load %arg13[%c9, %c0_18] : memref<28x32xf32, #tpu.memory_space<vmem>>, vector<16x32xf32>
    %19 = arith.truncf %18 : vector<16x32xf32> to vector<16x32xbf16>
    %20 = tpu.concatenate %15, %17, %19, %3 in 1 : vector<16x32xbf16>, vector<16x32xbf16>, vector<16x32xbf16>, vector<16x16xbf16> -> vector<16x112xbf16>
    %c0_19 = arith.constant 0 : index
    %c0_20 = arith.constant 0 : index
    %c0_21 = arith.constant 0 : index
    %21 = vector.load %arg4[%c0_19, %c0_20, %c0_21] : memref<3x112x32xbf16, #tpu.memory_space<vmem>>, vector<1x112x32xbf16>
    %22 = vector.shape_cast %21 : vector<1x112x32xbf16> to vector<112x32xbf16>
    %cst_22 = arith.constant dense<0.000000e+00> : vector<16x32xf32>
    %23 = tpu.matmul %20, %22, %cst_22 {dimension_numbers = #tpu.dot_dimension_numbers<[1], [0], [0], [1], [0, 0, 1, 1], [], []>} : vector<16x112xbf16>, vector<112x32xbf16>, vector<16x32xf32> -> vector<16x32xf32>
    %c0_23 = arith.constant 0 : index
    %c0_24 = arith.constant 0 : index
    %c0_25 = arith.constant 0 : index
    %24 = vector.load %arg5[%c0_23, %c0_24, %c0_25] : memref<3x112x32xbf16, #tpu.memory_space<vmem>>, vector<1x112x32xbf16>
    %25 = vector.shape_cast %24 : vector<1x112x32xbf16> to vector<112x32xbf16>
    %cst_26 = arith.constant dense<0.000000e+00> : vector<16x32xf32>
    %26 = tpu.matmul %20, %25, %cst_26 {dimension_numbers = #tpu.dot_dimension_numbers<[1], [0], [0], [1], [0, 0, 1, 1], [], []>} : vector<16x112xbf16>, vector<112x32xbf16>, vector<16x32xf32> -> vector<16x32xf32>
    %c0_27 = arith.constant 0 : index
    %c0_28 = arith.constant 0 : index
    %27 = vector.load %arg6[%c0_27, %c0_28] : memref<3x32xf32, #tpu.memory_space<vmem>>, vector<1x32xf32>
    %28 = vector.broadcast %27 : vector<1x32xf32> to vector<16x32xf32>
    %29 = arith.addf %23, %28 : vector<16x32xf32>
    %c0_29 = arith.constant 0 : index
    %c0_30 = arith.constant 0 : index
    %30 = vector.load %arg7[%c0_29, %c0_30] : memref<3x32xf32, #tpu.memory_space<vmem>>, vector<1x32xf32>
    %31 = vector.broadcast %30 : vector<1x32xf32> to vector<16x32xf32>
    %32 = arith.addf %26, %31 : vector<16x32xf32>
    %33 = math.tanh %29 : vector<16x32xf32>
    %34 = arith.negf %32 : vector<16x32xf32>
    %35 = math.exp %34 : vector<16x32xf32>
    %cst_31 = arith.constant 1.000000e+00 : f32
    %36 = vector.broadcast %cst_31 : f32 to vector<16x32xf32>
    %37 = arith.addf %36, %35 : vector<16x32xf32>
    %38 = arith.divf %36, %37 : vector<16x32xf32>
    %39 = arith.mulf %33, %38 : vector<16x32xf32>
    %40 = arith.truncf %39 : vector<16x32xf32> to vector<16x32xbf16>
    %c0_32 = arith.constant 0 : index
    %c0_33 = arith.constant 0 : index
    %c0_34 = arith.constant 0 : index
    %41 = vector.load %arg9[%c0_32, %c0_33, %c0_34] : memref<3x32x32xbf16, #tpu.memory_space<vmem>>, vector<1x32x32xbf16>
    %42 = vector.shape_cast %41 : vector<1x32x32xbf16> to vector<32x32xbf16>
    %cst_35 = arith.constant dense<0.000000e+00> : vector<16x32xf32>
    %43 = tpu.matmul %40, %42, %cst_35 {dimension_numbers = #tpu.dot_dimension_numbers<[1], [0], [0], [1], [0, 0, 1, 1], [], []>} : vector<16x32xbf16>, vector<32x32xbf16>, vector<16x32xf32> -> vector<16x32xf32>
    %c0_36 = arith.constant 0 : index
    %c0_37 = arith.constant 0 : index
    %c0_38 = arith.constant 0 : index
    %44 = vector.load %arg12[%c0_36, %c0_37, %c0_38] : memref<1x16x32xf32, #tpu.memory_space<vmem>>, vector<1x16x32xf32>
    %45 = vector.shape_cast %44 : vector<1x16x32xf32> to vector<16x32xf32>
    %46 = arith.addf %45, %43 : vector<16x32xf32>
    %c0_39 = arith.constant 0 : index
    %c0_40 = arith.constant 0 : index
    %47 = vector.load %arg11[%c0_39, %c0_40] : memref<3x32xf32, #tpu.memory_space<vmem>>, vector<1x32xf32>
    %48 = vector.broadcast %47 : vector<1x32xf32> to vector<16x32xf32>
    %49 = arith.addf %46, %48 : vector<16x32xf32>
    %c0_41 = arith.constant 0 : index
    %c0_42 = arith.constant 0 : index
    %c0_43 = arith.constant 0 : index
    %50 = vector.load %arg12[%c0_41, %c0_42, %c0_43] : memref<1x16x32xf32, #tpu.memory_space<vmem>>, vector<1x16x32xf32>
    %51 = vector.shape_cast %50 : vector<1x16x32xf32> to vector<16x32xf32>
    %52 = vector.shape_cast %49 : vector<16x32xf32> to vector<1x16x32xf32>
    tpu.vector_store %arg12[%c0_41, %c0_42, %c0_43], %52 {strides = array<i32>} : memref<1x16x32xf32, #tpu.memory_space<vmem>>, vector<1x16x32xf32>,
    %c0_44 = arith.constant 0 : index
    %c0_45 = arith.constant 0 : index
    %c0_46 = arith.constant 0 : index
    %53 = vector.load %arg8[%c0_44, %c0_45, %c0_46] : memref<3x32x32xbf16, #tpu.memory_space<vmem>>, vector<1x32x32xbf16>
    %54 = vector.shape_cast %53 : vector<1x32x32xbf16> to vector<32x32xbf16>
    %cst_47 = arith.constant dense<0.000000e+00> : vector<16x32xf32>
    %55 = tpu.matmul %40, %54, %cst_47 {dimension_numbers = #tpu.dot_dimension_numbers<[1], [0], [0], [1], [0, 0, 1, 1], [], []>} : vector<16x32xbf16>, vector<32x32xbf16>, vector<16x32xf32> -> vector<16x32xf32>
    %c0_48 = arith.constant 0 : index
    %c0_49 = arith.constant 0 : index
    %56 = vector.load %arg10[%c0_48, %c0_49] : memref<3x32xf32, #tpu.memory_space<vmem>>, vector<1x32xf32>
    %57 = vector.broadcast %56 : vector<1x32xf32> to vector<16x32xf32>
    %58 = arith.addf %55, %57 : vector<16x32xf32>
    %c8_50 = arith.constant 8 : index
    %c0_51 = arith.constant 0 : index
    %59 = vector.load %arg13[%c8_50, %c0_51] : memref<28x32xf32, #tpu.memory_space<vmem>>, vector<16x32xf32>
    %60 = arith.addf %59, %58 : vector<16x32xf32>
    %61 = vector.broadcast %1 : vector<16x1xf32> to vector<16x32xf32>
    %62 = arith.mulf %60, %61 : vector<16x32xf32>
    %c8_52 = arith.constant 8 : index
    %c0_53 = arith.constant 0 : index
    %63 = vector.load %arg13[%c8_52, %c0_53] : memref<28x32xf32, #tpu.memory_space<vmem>>, vector<16x32xf32>
    tpu.vector_store %arg13[%c8_52, %c0_53], %62 {strides = array<i32>} : memref<28x32xf32, #tpu.memory_space<vmem>>, vector<16x32xf32>,
    %c6 = arith.constant 6 : index
    %c0_54 = arith.constant 0 : index
    %64 = vector.load %arg13[%c6, %c0_54] : memref<28x32xf32, #tpu.memory_space<vmem>>, vector<16x32xf32>
    %65 = arith.truncf %64 : vector<16x32xf32> to vector<16x32xbf16>
    %c8_55 = arith.constant 8 : index
    %c0_56 = arith.constant 0 : index
    %66 = vector.load %arg13[%c8_55, %c0_56] : memref<28x32xf32, #tpu.memory_space<vmem>>, vector<16x32xf32>
    %67 = arith.truncf %66 : vector<16x32xf32> to vector<16x32xbf16>
    %c10 = arith.constant 10 : index
    %c0_57 = arith.constant 0 : index
    %68 = vector.load %arg13[%c10, %c0_57] : memref<28x32xf32, #tpu.memory_space<vmem>>, vector<16x32xf32>
    %69 = arith.truncf %68 : vector<16x32xf32> to vector<16x32xbf16>
    %70 = tpu.concatenate %65, %67, %69, %3 in 1 : vector<16x32xbf16>, vector<16x32xbf16>, vector<16x32xbf16>, vector<16x16xbf16> -> vector<16x112xbf16>
    %c1 = arith.constant 1 : index
    %c0_58 = arith.constant 0 : index
    %c0_59 = arith.constant 0 : index
    %71 = vector.load %arg4[%c1, %c0_58, %c0_59] : memref<3x112x32xbf16, #tpu.memory_space<vmem>>, vector<1x112x32xbf16>
    %72 = vector.shape_cast %71 : vector<1x112x32xbf16> to vector<112x32xbf16>
    %cst_60 = arith.constant dense<0.000000e+00> : vector<16x32xf32>
    %73 = tpu.matmul %70, %72, %cst_60 {dimension_numbers = #tpu.dot_dimension_numbers<[1], [0], [0], [1], [0, 0, 1, 1], [], []>} : vector<16x112xbf16>, vector<112x32xbf16>, vector<16x32xf32> -> vector<16x32xf32>
    %c1_61 = arith.constant 1 : index
    %c0_62 = arith.constant 0 : index
    %c0_63 = arith.constant 0 : index
    %74 = vector.load %arg5[%c1_61, %c0_62, %c0_63] : memref<3x112x32xbf16, #tpu.memory_space<vmem>>, vector<1x112x32xbf16>
    %75 = vector.shape_cast %74 : vector<1x112x32xbf16> to vector<112x32xbf16>
    %cst_64 = arith.constant dense<0.000000e+00> : vector<16x32xf32>
    %76 = tpu.matmul %70, %75, %cst_64 {dimension_numbers = #tpu.dot_dimension_numbers<[1], [0], [0], [1], [0, 0, 1, 1], [], []>} : vector<16x112xbf16>, vector<112x32xbf16>, vector<16x32xf32> -> vector<16x32xf32>
    %c1_65 = arith.constant 1 : index
    %c0_66 = arith.constant 0 : index
    %77 = vector.load %arg6[%c1_65, %c0_66] : memref<3x32xf32, #tpu.memory_space<vmem>>, vector<1x32xf32>
    %78 = vector.broadcast %77 : vector<1x32xf32> to vector<16x32xf32>
    %79 = arith.addf %73, %78 : vector<16x32xf32>
    %c1_67 = arith.constant 1 : index
    %c0_68 = arith.constant 0 : index
    %80 = vector.load %arg7[%c1_67, %c0_68] : memref<3x32xf32, #tpu.memory_space<vmem>>, vector<1x32xf32>
    %81 = vector.broadcast %80 : vector<1x32xf32> to vector<16x32xf32>
    %82 = arith.addf %76, %81 : vector<16x32xf32>
    %83 = math.tanh %79 : vector<16x32xf32>
    %84 = arith.negf %82 : vector<16x32xf32>
    %85 = math.exp %84 : vector<16x32xf32>
    %cst_69 = arith.constant 1.000000e+00 : f32
    %86 = vector.broadcast %cst_69 : f32 to vector<16x32xf32>
    %87 = arith.addf %86, %85 : vector<16x32xf32>
    %88 = arith.divf %86, %87 : vector<16x32xf32>
    %89 = arith.mulf %83, %88 : vector<16x32xf32>
    %90 = arith.truncf %89 : vector<16x32xf32> to vector<16x32xbf16>
    %c1_70 = arith.constant 1 : index
    %c0_71 = arith.constant 0 : index
    %c0_72 = arith.constant 0 : index
    %91 = vector.load %arg9[%c1_70, %c0_71, %c0_72] : memref<3x32x32xbf16, #tpu.memory_space<vmem>>, vector<1x32x32xbf16>
    %92 = vector.shape_cast %91 : vector<1x32x32xbf16> to vector<32x32xbf16>
    %cst_73 = arith.constant dense<0.000000e+00> : vector<16x32xf32>
    %93 = tpu.matmul %90, %92, %cst_73 {dimension_numbers = #tpu.dot_dimension_numbers<[1], [0], [0], [1], [0, 0, 1, 1], [], []>} : vector<16x32xbf16>, vector<32x32xbf16>, vector<16x32xf32> -> vector<16x32xf32>
    %c0_74 = arith.constant 0 : index
    %c0_75 = arith.constant 0 : index
    %c0_76 = arith.constant 0 : index
    %94 = vector.load %arg12[%c0_74, %c0_75, %c0_76] : memref<1x16x32xf32, #tpu.memory_space<vmem>>, vector<1x16x32xf32>
    %95 = vector.shape_cast %94 : vector<1x16x32xf32> to vector<16x32xf32>
    %96 = arith.addf %95, %93 : vector<16x32xf32>
    %c1_77 = arith.constant 1 : index
    %c0_78 = arith.constant 0 : index
    %97 = vector.load %arg11[%c1_77, %c0_78] : memref<3x32xf32, #tpu.memory_space<vmem>>, vector<1x32xf32>
    %98 = vector.broadcast %97 : vector<1x32xf32> to vector<16x32xf32>
    %99 = arith.addf %96, %98 : vector<16x32xf32>
    %c0_79 = arith.constant 0 : index
    %c0_80 = arith.constant 0 : index
    %c0_81 = arith.constant 0 : index
    %100 = vector.load %arg12[%c0_79, %c0_80, %c0_81] : memref<1x16x32xf32, #tpu.memory_space<vmem>>, vector<1x16x32xf32>
    %101 = vector.shape_cast %100 : vector<1x16x32xf32> to vector<16x32xf32>
    %102 = vector.shape_cast %99 : vector<16x32xf32> to vector<1x16x32xf32>
    tpu.vector_store %arg12[%c0_79, %c0_80, %c0_81], %102 {strides = array<i32>} : memref<1x16x32xf32, #tpu.memory_space<vmem>>, vector<1x16x32xf32>,
    %c1_82 = arith.constant 1 : index
    %c0_83 = arith.constant 0 : index
    %c0_84 = arith.constant 0 : index
    %103 = vector.load %arg8[%c1_82, %c0_83, %c0_84] : memref<3x32x32xbf16, #tpu.memory_space<vmem>>, vector<1x32x32xbf16>
    %104 = vector.shape_cast %103 : vector<1x32x32xbf16> to vector<32x32xbf16>
    %cst_85 = arith.constant dense<0.000000e+00> : vector<16x32xf32>
    %105 = tpu.matmul %90, %104, %cst_85 {dimension_numbers = #tpu.dot_dimension_numbers<[1], [0], [0], [1], [0, 0, 1, 1], [], []>} : vector<16x32xbf16>, vector<32x32xbf16>, vector<16x32xf32> -> vector<16x32xf32>
    %c1_86 = arith.constant 1 : index
    %c0_87 = arith.constant 0 : index
    %106 = vector.load %arg10[%c1_86, %c0_87] : memref<3x32xf32, #tpu.memory_space<vmem>>, vector<1x32xf32>
    %107 = vector.broadcast %106 : vector<1x32xf32> to vector<16x32xf32>
    %108 = arith.addf %105, %107 : vector<16x32xf32>
    %c8_88 = arith.constant 8 : index
    %c0_89 = arith.constant 0 : index
    %109 = vector.load %arg13[%c8_88, %c0_89] : memref<28x32xf32, #tpu.memory_space<vmem>>, vector<16x32xf32>
    %110 = arith.addf %109, %108 : vector<16x32xf32>
    %111 = vector.broadcast %1 : vector<16x1xf32> to vector<16x32xf32>
    %112 = arith.mulf %110, %111 : vector<16x32xf32>
    %c8_90 = arith.constant 8 : index
    %c0_91 = arith.constant 0 : index
    %113 = vector.load %arg13[%c8_90, %c0_91] : memref<28x32xf32, #tpu.memory_space<vmem>>, vector<16x32xf32>
    tpu.vector_store %arg13[%c8_90, %c0_91], %112 {strides = array<i32>} : memref<28x32xf32, #tpu.memory_space<vmem>>, vector<16x32xf32>,
    %c4 = arith.constant 4 : index
    %c0_92 = arith.constant 0 : index
    %114 = vector.load %arg13[%c4, %c0_92] : memref<28x32xf32, #tpu.memory_space<vmem>>, vector<16x32xf32>
    %115 = arith.truncf %114 : vector<16x32xf32> to vector<16x32xbf16>
    %c8_93 = arith.constant 8 : index
    %c0_94 = arith.constant 0 : index
    %116 = vector.load %arg13[%c8_93, %c0_94] : memref<28x32xf32, #tpu.memory_space<vmem>>, vector<16x32xf32>
    %117 = arith.truncf %116 : vector<16x32xf32> to vector<16x32xbf16>
    %c12 = arith.constant 12 : index
    %c0_95 = arith.constant 0 : index
    %118 = vector.load %arg13[%c12, %c0_95] : memref<28x32xf32, #tpu.memory_space<vmem>>, vector<16x32xf32>
    %119 = arith.truncf %118 : vector<16x32xf32> to vector<16x32xbf16>
    %120 = tpu.concatenate %115, %117, %119, %3 in 1 : vector<16x32xbf16>, vector<16x32xbf16>, vector<16x32xbf16>, vector<16x16xbf16> -> vector<16x112xbf16>
    %c2 = arith.constant 2 : index
    %c0_96 = arith.constant 0 : index
    %c0_97 = arith.constant 0 : index
    %121 = vector.load %arg4[%c2, %c0_96, %c0_97] : memref<3x112x32xbf16, #tpu.memory_space<vmem>>, vector<1x112x32xbf16>
    %122 = vector.shape_cast %121 : vector<1x112x32xbf16> to vector<112x32xbf16>
    %cst_98 = arith.constant dense<0.000000e+00> : vector<16x32xf32>
    %123 = tpu.matmul %120, %122, %cst_98 {dimension_numbers = #tpu.dot_dimension_numbers<[1], [0], [0], [1], [0, 0, 1, 1], [], []>} : vector<16x112xbf16>, vector<112x32xbf16>, vector<16x32xf32> -> vector<16x32xf32>
    %c2_99 = arith.constant 2 : index
    %c0_100 = arith.constant 0 : index
    %c0_101 = arith.constant 0 : index
    %124 = vector.load %arg5[%c2_99, %c0_100, %c0_101] : memref<3x112x32xbf16, #tpu.memory_space<vmem>>, vector<1x112x32xbf16>
    %125 = vector.shape_cast %124 : vector<1x112x32xbf16> to vector<112x32xbf16>
    %cst_102 = arith.constant dense<0.000000e+00> : vector<16x32xf32>
    %126 = tpu.matmul %120, %125, %cst_102 {dimension_numbers = #tpu.dot_dimension_numbers<[1], [0], [0], [1], [0, 0, 1, 1], [], []>} : vector<16x112xbf16>, vector<112x32xbf16>, vector<16x32xf32> -> vector<16x32xf32>
    %c2_103 = arith.constant 2 : index
    %c0_104 = arith.constant 0 : index
    %127 = vector.load %arg6[%c2_103, %c0_104] : memref<3x32xf32, #tpu.memory_space<vmem>>, vector<1x32xf32>
    %128 = vector.broadcast %127 : vector<1x32xf32> to vector<16x32xf32>
    %129 = arith.addf %123, %128 : vector<16x32xf32>
    %c2_105 = arith.constant 2 : index
    %c0_106 = arith.constant 0 : index
    %130 = vector.load %arg7[%c2_105, %c0_106] : memref<3x32xf32, #tpu.memory_space<vmem>>, vector<1x32xf32>
    %131 = vector.broadcast %130 : vector<1x32xf32> to vector<16x32xf32>
    %132 = arith.addf %126, %131 : vector<16x32xf32>
    %133 = math.tanh %129 : vector<16x32xf32>
    %134 = arith.negf %132 : vector<16x32xf32>
    %135 = math.exp %134 : vector<16x32xf32>
    %cst_107 = arith.constant 1.000000e+00 : f32
    %136 = vector.broadcast %cst_107 : f32 to vector<16x32xf32>
    %137 = arith.addf %136, %135 : vector<16x32xf32>
    %138 = arith.divf %136, %137 : vector<16x32xf32>
    %139 = arith.mulf %133, %138 : vector<16x32xf32>
    %140 = arith.truncf %139 : vector<16x32xf32> to vector<16x32xbf16>
    %c2_108 = arith.constant 2 : index
    %c0_109 = arith.constant 0 : index
    %c0_110 = arith.constant 0 : index
    %141 = vector.load %arg9[%c2_108, %c0_109, %c0_110] : memref<3x32x32xbf16, #tpu.memory_space<vmem>>, vector<1x32x32xbf16>
    %142 = vector.shape_cast %141 : vector<1x32x32xbf16> to vector<32x32xbf16>
    %cst_111 = arith.constant dense<0.000000e+00> : vector<16x32xf32>
    %143 = tpu.matmul %140, %142, %cst_111 {dimension_numbers = #tpu.dot_dimension_numbers<[1], [0], [0], [1], [0, 0, 1, 1], [], []>} : vector<16x32xbf16>, vector<32x32xbf16>, vector<16x32xf32> -> vector<16x32xf32>
    %c0_112 = arith.constant 0 : index
    %c0_113 = arith.constant 0 : index
    %c0_114 = arith.constant 0 : index
    %144 = vector.load %arg12[%c0_112, %c0_113, %c0_114] : memref<1x16x32xf32, #tpu.memory_space<vmem>>, vector<1x16x32xf32>
    %145 = vector.shape_cast %144 : vector<1x16x32xf32> to vector<16x32xf32>
    %146 = arith.addf %145, %143 : vector<16x32xf32>
    %c2_115 = arith.constant 2 : index
    %c0_116 = arith.constant 0 : index
    %147 = vector.load %arg11[%c2_115, %c0_116] : memref<3x32xf32, #tpu.memory_space<vmem>>, vector<1x32xf32>
    %148 = vector.broadcast %147 : vector<1x32xf32> to vector<16x32xf32>
    %149 = arith.addf %146, %148 : vector<16x32xf32>
    %c0_117 = arith.constant 0 : index
    %c0_118 = arith.constant 0 : index
    %c0_119 = arith.constant 0 : index
    %150 = vector.load %arg12[%c0_117, %c0_118, %c0_119] : memref<1x16x32xf32, #tpu.memory_space<vmem>>, vector<1x16x32xf32>
    %151 = vector.shape_cast %150 : vector<1x16x32xf32> to vector<16x32xf32>
    %152 = vector.shape_cast %149 : vector<16x32xf32> to vector<1x16x32xf32>
    tpu.vector_store %arg12[%c0_117, %c0_118, %c0_119], %152 {strides = array<i32>} : memref<1x16x32xf32, #tpu.memory_space<vmem>>, vector<1x16x32xf32>,
    %c0_120 = arith.constant 0 : index
    %c0_121 = arith.constant 0 : index
    %c0_122 = arith.constant 0 : index
    %153 = vector.load %arg12[%c0_120, %c0_121, %c0_122] : memref<1x16x32xf32, #tpu.memory_space<vmem>>, vector<1x16x32xf32>
    %154 = vector.shape_cast %153 : vector<1x16x32xf32> to vector<16x32xf32>
    %155 = vector.broadcast %1 : vector<16x1xf32> to vector<16x32xf32>
    %156 = arith.mulf %154, %155 : vector<16x32xf32>
    %c0_123 = arith.constant 0 : index
    %c0_124 = arith.constant 0 : index
    %c0_125 = arith.constant 0 : index
    %157 = vector.load %arg12[%c0_123, %c0_124, %c0_125] : memref<1x16x32xf32, #tpu.memory_space<vmem>>, vector<1x16x32xf32>
    %158 = vector.shape_cast %157 : vector<1x16x32xf32> to vector<16x32xf32>
    %159 = vector.shape_cast %156 : vector<16x32xf32> to vector<1x16x32xf32>
    tpu.vector_store %arg12[%c0_123, %c0_124, %c0_125], %159 {strides = array<i32>} : memref<1x16x32xf32, #tpu.memory_space<vmem>>, vector<1x16x32xf32>,
    return
  }
  func.func @transform_0(%arg0: i32) -> (i32, i32, i32) {
    %c0_i32 = arith.constant 0 : i32
    %c0_i32_0 = arith.constant 0 : i32
    %c0_i32_1 = arith.constant 0 : i32
    return %arg0, %c0_i32, %c0_i32_0 : i32, i32, i32
  }
  func.func @transform_1(%arg0: i32) -> (i32, i32, i32) {
    %c0_i32 = arith.constant 0 : i32
    %c0_i32_0 = arith.constant 0 : i32
    %c0_i32_1 = arith.constant 0 : i32
    return %arg0, %c0_i32, %c0_i32_0 : i32, i32, i32
  }
  func.func @transform_2(%arg0: i32) -> (i32, i32, i32) {
    %c0_i32 = arith.constant 0 : i32
    %c0_i32_0 = arith.constant 0 : i32
    %c0_i32_1 = arith.constant 0 : i32
    return %arg0, %c0_i32, %c0_i32_0 : i32, i32, i32
  }
  func.func @transform_3(%arg0: i32) -> (i32, i32, i32) {
    %c0_i32 = arith.constant 0 : i32
    %c0_i32_0 = arith.constant 0 : i32
    %c0_i32_1 = arith.constant 0 : i32
    %c0_i32_2 = arith.constant 0 : i32
    return %c0_i32, %c0_i32_0, %c0_i32_1 : i32, i32, i32
  }
  func.func @transform_4(%arg0: i32) -> (i32, i32, i32) {
    %c0_i32 = arith.constant 0 : i32
    %c0_i32_0 = arith.constant 0 : i32
    %c0_i32_1 = arith.constant 0 : i32
    %c0_i32_2 = arith.constant 0 : i32
    return %c0_i32, %c0_i32_0, %c0_i32_1 : i32, i32, i32
  }
  func.func @transform_5(%arg0: i32) -> (i32, i32) {
    %c0_i32 = arith.constant 0 : i32
    %c0_i32_0 = arith.constant 0 : i32
    %c0_i32_1 = arith.constant 0 : i32
    return %c0_i32, %c0_i32_0 : i32, i32
  }
  func.func @transform_6(%arg0: i32) -> (i32, i32) {
    %c0_i32 = arith.constant 0 : i32
    %c0_i32_0 = arith.constant 0 : i32
    %c0_i32_1 = arith.constant 0 : i32
    return %c0_i32, %c0_i32_0 : i32, i32
  }
  func.func @transform_7(%arg0: i32) -> (i32, i32, i32) {
    %c0_i32 = arith.constant 0 : i32
    %c0_i32_0 = arith.constant 0 : i32
    %c0_i32_1 = arith.constant 0 : i32
    %c0_i32_2 = arith.constant 0 : i32
    return %c0_i32, %c0_i32_0, %c0_i32_1 : i32, i32, i32
  }
  func.func @transform_8(%arg0: i32) -> (i32, i32, i32) {
    %c0_i32 = arith.constant 0 : i32
    %c0_i32_0 = arith.constant 0 : i32
    %c0_i32_1 = arith.constant 0 : i32
    %c0_i32_2 = arith.constant 0 : i32
    return %c0_i32, %c0_i32_0, %c0_i32_1 : i32, i32, i32
  }
  func.func @transform_9(%arg0: i32) -> (i32, i32) {
    %c0_i32 = arith.constant 0 : i32
    %c0_i32_0 = arith.constant 0 : i32
    %c0_i32_1 = arith.constant 0 : i32
    return %c0_i32, %c0_i32_0 : i32, i32
  }
  func.func @transform_10(%arg0: i32) -> (i32, i32) {
    %c0_i32 = arith.constant 0 : i32
    %c0_i32_0 = arith.constant 0 : i32
    %c0_i32_1 = arith.constant 0 : i32
    return %c0_i32, %c0_i32_0 : i32, i32
  }
  func.func @transform_11(%arg0: i32) -> (i32, i32, i32) {
    %c0_i32 = arith.constant 0 : i32
    %c0_i32_0 = arith.constant 0 : i32
    %c0_i32_1 = arith.constant 0 : i32
    return %arg0, %c0_i32, %c0_i32_0 : i32, i32, i32
  }
}

</mosaic_0001>

<llo_original>
// kernel: tpu_custom_call.1
$region0: #{tpu_custom_call.1}
  #allocation0 [shape = 'u32[]', space=smem, size = 0x4, offset = 0x4, fixed_abs, tag = 'smem constant byte address 0x4 - core index']
  #allocation1 [shape = 'u32[144,128]{1,0:T(1,128)}', space=vmem, size = 0x12000, scoped, tag = 'internal scratch']
  #allocation2 [shape = 'f32[28,32]{1,0:T(8,128)}', space=vmem, size = 0x4000, scoped, tag = 'scratch operand']
  %s0 = inlined_call_operand.vmem [shape: bf16[2,16,32], index: 0, kind: input, shape index: {}]
  %s1 = inlined_call_operand.vmem [shape: f32[2,16,1], index: 1, kind: input, shape index: {}]
  %s2 = inlined_call_operand.vmem [shape: bf16[2,16,16], index: 2, kind: input, shape index: {}]
  %s3 = inlined_call_operand.vmem [shape: bf16[3,112,32], index: 3, kind: input, shape index: {}]
  %s4 = inlined_call_operand.vmem [shape: bf16[3,112,32], index: 4, kind: input, shape index: {}]
  %s5 = inlined_call_operand.vmem [shape: f32[3,32], index: 5, kind: input, shape index: {}]
  %s6 = inlined_call_operand.vmem [shape: f32[3,32], index: 6, kind: input, shape index: {}]
  %s7 = inlined_call_operand.vmem [shape: bf16[3,32,32], index: 7, kind: input, shape index: {}]
  %s8 = inlined_call_operand.vmem [shape: bf16[3,32,32], index: 8, kind: input, shape index: {}]
  %s9 = inlined_call_operand.vmem [shape: f32[3,32], index: 9, kind: input, shape index: {}]
  %s10 = inlined_call_operand.vmem [shape: f32[3,32], index: 10, kind: input, shape index: {}]
  %s11 = inlined_call_operand.hbm [shape: f32[2,16,32], index: 11, kind: output, shape index: {}]
  %s12 = sld [smem:[#allocation0]]
  $region77: #{tpu_custom_call.1} parent=0
    _
  %s14 = ssub.s32 1, %s12
  %s15 = scalar_select 0, %s14, %s12
  $region1: #{tpu_custom_call.1} parent=0
    #allocation3 [shape = 'u8[16384]{0}', space=vmem, size = 0x4000, scoped, tag = 'output window, operand 0']
    #allocation4 [shape = 's32[2]{0}', space=sflag, size = 0x8, scoped, tag = 'scoped memory for tpu_custom_call.1']
    %16 = vsyncpa [#allocation4], 0
    %s17 = scalar_lea.sflag [#allocation4], 1
    %18 = vsyncpa %s17, 0
    loop: start=0, step=1, limit=4
    $region2: #{tpu_custom_call.1} parent=1 // loop_pre_header
      _
    $region3: #{tpu_custom_call.1} parent=1 // loop_header
      %s20 = sphi 0, %s24
      %p21 = scmp.ge.s32.totalorder %s20, 4
      %s30 = sphi 0, %s32
      %s33 = sphi 0, %s30
      %s34 = sphi 0, %s33
      %s50 = sphi 0, %s34
      %s56 = sphi 0, %s58
      %s59 = sphi 0, %s56
      %s60 = sphi 0, %s59
      %s76 = sphi 0, %s60
      %s82 = sphi 0, %s84
      %s85 = sphi 0, %s82
      %s86 = sphi 0, %s85
      %s102 = sphi 0, %s86
      %s106 = sphi 0, %s106
      %s108 = sphi 0, %s106
      %s109 = sphi 0, %s108
      %s123 = sphi 0, %s109
      %s127 = sphi 0, %s127
      %s129 = sphi 0, %s127
      %s130 = sphi 0, %s129
      %s144 = sphi 0, %s130
      %s148 = sphi 0, %s148
      %s150 = sphi 0, %s148
      %s151 = sphi 0, %s150
      %s165 = sphi 0, %s151
      %s169 = sphi 0, %s169
      %s171 = sphi 0, %s169
      %s172 = sphi 0, %s171
      %s186 = sphi 0, %s172
      %s190 = sphi 0, %s190
      %s192 = sphi 0, %s190
      %s193 = sphi 0, %s192
      %s207 = sphi 0, %s193
      %s211 = sphi 0, %s211
      %s213 = sphi 0, %s211
      %s214 = sphi 0, %s213
      %s228 = sphi 0, %s214
      %s232 = sphi 0, %s232
      %s234 = sphi 0, %s232
      %s235 = sphi 0, %s234
      %s249 = sphi 0, %s235
      %s253 = sphi 0, %s253
      %s255 = sphi 0, %s253
      %s256 = sphi 0, %s255
      %s270 = sphi 0, %s256
      %s276 = sphi 0, %s278
      %s279 = sphi 0, %s276
      %s280 = sphi 0, %s279
      %s296 = sphi 0, %s280
    $region4: #{tpu_custom_call.1} parent=1 // loop_header_branch
      %23 = sbr.rel (%p21) target = $region8
    $region5: #{tpu_custom_call.1} parent=1 // loop_body
      %s25 = ssub.s32 %s20, 1
      %s26 = ssub.s32 %s20, 2
      %s27 = sadd.s32 %s20, 1
      %s28 = ssub.s32 %s20, %s27
      %p29 = scmp.eq.s32.totalorder %s28, 0
      %s31 = sadd.s32 %s30, 1
      %s32 = scalar_select %p29, %s30, %s31
      %p35 = pneg %p29
      %p36 = scmp.eq.s32.totalorder %s20, 1
      %p37 = por %p35, %p36
      %p38 = scmp.ne.s32.totalorder %s30, %s33
      %p39 = scmp.eq.s32.totalorder %s20, 0
      %p40 = por %p38, %p39
      %p41 = scmp.ne.s32.totalorder %s30, %s33
      %p42 = scmp.eq.s32.totalorder %s25, 1
      %p43 = por %p41, %p42
      %p44 = scmp.ne.s32.totalorder %s33, %s34
      %p45 = scmp.eq.s32.totalorder %s25, 0
      %p46 = por %p44, %p45
      %p47 = scmp.ne.s32.totalorder %s33, %s34
      %p48 = scmp.eq.s32.totalorder %s26, 1
      %p49 = por %p47, %p48
      %p51 = scmp.ne.s32.totalorder %s34, %s50
      %p52 = scmp.eq.s32.totalorder %s26, 0
      %p53 = por %p51, %p52
      %s54 = ssub.s32 %s20, %s27
      %p55 = scmp.eq.s32.totalorder %s54, 0
      %s57 = sadd.s32 %s56, 1
      %s58 = scalar_select %p55, %s56, %s57
      %p61 = pneg %p55
      %p62 = scmp.eq.s32.totalorder %s20, 1
      %p63 = por %p61, %p62
      %p64 = scmp.ne.s32.totalorder %s56, %s59
      %p65 = scmp.eq.s32.totalorder %s20, 0
      %p66 = por %p64, %p65
      %p67 = scmp.ne.s32.totalorder %s56, %s59
      %p68 = scmp.eq.s32.totalorder %s25, 1
      %p69 = por %p67, %p68
      %p70 = scmp.ne.s32.totalorder %s59, %s60
      %p71 = scmp.eq.s32.totalorder %s25, 0
      %p72 = por %p70, %p71
      %p73 = scmp.ne.s32.totalorder %s59, %s60
      %p74 = scmp.eq.s32.totalorder %s26, 1
      %p75 = por %p73, %p74
      %p77 = scmp.ne.s32.totalorder %s60, %s76
      %p78 = scmp.eq.s32.totalorder %s26, 0
      %p79 = por %p77, %p78
      %s80 = ssub.s32 %s20, %s27
      %p81 = scmp.eq.s32.totalorder %s80, 0
      %s83 = sadd.s32 %s82, 1
      %s84 = scalar_select %p81, %s82, %s83
      %p87 = pneg %p81
      %p88 = scmp.eq.s32.totalorder %s20, 1
      %p89 = por %p87, %p88
      %p90 = scmp.ne.s32.totalorder %s82, %s85
      %p91 = scmp.eq.s32.totalorder %s20, 0
      %p92 = por %p90, %p91
      %p93 = scmp.ne.s32.totalorder %s82, %s85
      %p94 = scmp.eq.s32.totalorder %s25, 1
      %p95 = por %p93, %p94
      %p96 = scmp.ne.s32.totalorder %s85, %s86
      %p97 = scmp.eq.s32.totalorder %s25, 0
      %p98 = por %p96, %p97
      %p99 = scmp.ne.s32.totalorder %s85, %s86
      %p100 = scmp.eq.s32.totalorder %s26, 1
      %p101 = por %p99, %p100
      %p103 = scmp.ne.s32.totalorder %s86, %s102
      %p104 = scmp.eq.s32.totalorder %s26, 0
      %p105 = por %p103, %p104
      %s107 = sadd.s32 %s106, 1
      %p110 = scmp.eq.s32.totalorder %s20, 1
      %p111 = scmp.ne.s32.totalorder %s106, %s108
      %p112 = scmp.eq.s32.totalorder %s20, 0
      %p113 = por %p111, %p112
      %p114 = scmp.ne.s32.totalorder %s106, %s108
      %p115 = scmp.eq.s32.totalorder %s25, 1
      %p116 = por %p114, %p115
      %p117 = scmp.ne.s32.totalorder %s108, %s109
      %p118 = scmp.eq.s32.totalorder %s25, 0
      %p119 = por %p117, %p118
      %p120 = scmp.ne.s32.totalorder %s108, %s109
      %p121 = scmp.eq.s32.totalorder %s26, 1
      %p122 = por %p120, %p121
      %p124 = scmp.ne.s32.totalorder %s109, %s123
      %p125 = scmp.eq.s32.totalorder %s26, 0
      %p126 = por %p124, %p125
      %s128 = sadd.s32 %s127, 1
      %p131 = scmp.eq.s32.totalorder %s20, 1
      %p132 = scmp.ne.s32.totalorder %s127, %s129
      %p133 = scmp.eq.s32.totalorder %s20, 0
      %p134 = por %p132, %p133
      %p135 = scmp.ne.s32.totalorder %s127, %s129
      %p136 = scmp.eq.s32.totalorder %s25, 1
      %p137 = por %p135, %p136
      %p138 = scmp.ne.s32.totalorder %s129, %s130
      %p139 = scmp.eq.s32.totalorder %s25, 0
      %p140 = por %p138, %p139
      %p141 = scmp.ne.s32.totalorder %s129, %s130
      %p142 = scmp.eq.s32.totalorder %s26, 1
      %p143 = por %p141, %p142
      %p145 = scmp.ne.s32.totalorder %s130, %s144
      %p146 = scmp.eq.s32.totalorder %s26, 0
      %p147 = por %p145, %p146
      %s149 = sadd.s32 %s148, 1
      %p152 = scmp.eq.s32.totalorder %s20, 1
      %p153 = scmp.ne.s32.totalorder %s148, %s150
      %p154 = scmp.eq.s32.totalorder %s20, 0
      %p155 = por %p153, %p154
      %p156 = scmp.ne.s32.totalorder %s148, %s150
      %p157 = scmp.eq.s32.totalorder %s25, 1
      %p158 = por %p156, %p157
      %p159 = scmp.ne.s32.totalorder %s150, %s151
      %p160 = scmp.eq.s32.totalorder %s25, 0
      %p161 = por %p159, %p160
      %p162 = scmp.ne.s32.totalorder %s150, %s151
      %p163 = scmp.eq.s32.totalorder %s26, 1
      %p164 = por %p162, %p163
      %p166 = scmp.ne.s32.totalorder %s151, %s165
      %p167 = scmp.eq.s32.totalorder %s26, 0
      %p168 = por %p166, %p167
      %s170 = sadd.s32 %s169, 1
      %p173 = scmp.eq.s32.totalorder %s20, 1
      %p174 = scmp.ne.s32.totalorder %s169, %s171
      %p175 = scmp.eq.s32.totalorder %s20, 0
      %p176 = por %p174, %p175
      %p177 = scmp.ne.s32.totalorder %s169, %s171
      %p178 = scmp.eq.s32.totalorder %s25, 1
      %p179 = por %p177, %p178
      %p180 = scmp.ne.s32.totalorder %s171, %s172
      %p181 = scmp.eq.s32.totalorder %s25, 0
      %p182 = por %p180, %p181
      %p183 = scmp.ne.s32.totalorder %s171, %s172
      %p184 = scmp.eq.s32.totalorder %s26, 1
      %p185 = por %p183, %p184
      %p187 = scmp.ne.s32.totalorder %s172, %s186
      %p188 = scmp.eq.s32.totalorder %s26, 0
      %p189 = por %p187, %p188
      %s191 = sadd.s32 %s190, 1
      %p194 = scmp.eq.s32.totalorder %s20, 1
      %p195 = scmp.ne.s32.totalorder %s190, %s192
      %p196 = scmp.eq.s32.totalorder %s20, 0
      %p197 = por %p195, %p196
      %p198 = scmp.ne.s32.totalorder %s190, %s192
      %p199 = scmp.eq.s32.totalorder %s25, 1
      %p200 = por %p198, %p199
      %p201 = scmp.ne.s32.totalorder %s192, %s193
      %p202 = scmp.eq.s32.totalorder %s25, 0
      %p203 = por %p201, %p202
      %p204 = scmp.ne.s32.totalorder %s192, %s193
      %p205 = scmp.eq.s32.totalorder %s26, 1
      %p206 = por %p204, %p205
      %p208 = scmp.ne.s32.totalorder %s193, %s207
      %p209 = scmp.eq.s32.totalorder %s26, 0
      %p210 = por %p208, %p209
      %s212 = sadd.s32 %s211, 1
      %p215 = scmp.eq.s32.totalorder %s20, 1
      %p216 = scmp.ne.s32.totalorder %s211, %s213
      %p217 = scmp.eq.s32.totalorder %s20, 0
      %p218 = por %p216, %p217
      %p219 = scmp.ne.s32.totalorder %s211, %s213
      %p220 = scmp.eq.s32.totalorder %s25, 1
      %p221 = por %p219, %p220
      %p222 = scmp.ne.s32.totalorder %s213, %s214
      %p223 = scmp.eq.s32.totalorder %s25, 0
      %p224 = por %p222, %p223
      %p225 = scmp.ne.s32.totalorder %s213, %s214
      %p226 = scmp.eq.s32.totalorder %s26, 1
      %p227 = por %p225, %p226
      %p229 = scmp.ne.s32.totalorder %s214, %s228
      %p230 = scmp.eq.s32.totalorder %s26, 0
      %p231 = por %p229, %p230
      %s233 = sadd.s32 %s232, 1
      %p236 = scmp.eq.s32.totalorder %s20, 1
      %p237 = scmp.ne.s32.totalorder %s232, %s234
      %p238 = scmp.eq.s32.totalorder %s20, 0
      %p239 = por %p237, %p238
      %p240 = scmp.ne.s32.totalorder %s232, %s234
      %p241 = scmp.eq.s32.totalorder %s25, 1
      %p242 = por %p240, %p241
      %p243 = scmp.ne.s32.totalorder %s234, %s235
      %p244 = scmp.eq.s32.totalorder %s25, 0
      %p245 = por %p243, %p244
      %p246 = scmp.ne.s32.totalorder %s234, %s235
      %p247 = scmp.eq.s32.totalorder %s26, 1
      %p248 = por %p246, %p247
      %p250 = scmp.ne.s32.totalorder %s235, %s249
      %p251 = scmp.eq.s32.totalorder %s26, 0
      %p252 = por %p250, %p251
      %s254 = sadd.s32 %s253, 1
      %p257 = scmp.eq.s32.totalorder %s20, 1
      %p258 = scmp.ne.s32.totalorder %s253, %s255
      %p259 = scmp.eq.s32.totalorder %s20, 0
      %p260 = por %p258, %p259
      %p261 = scmp.ne.s32.totalorder %s253, %s255
      %p262 = scmp.eq.s32.totalorder %s25, 1
      %p263 = por %p261, %p262
      %p264 = scmp.ne.s32.totalorder %s255, %s256
      %p265 = scmp.eq.s32.totalorder %s25, 0
      %p266 = por %p264, %p265
      %p267 = scmp.ne.s32.totalorder %s255, %s256
      %p268 = scmp.eq.s32.totalorder %s26, 1
      %p269 = por %p267, %p268
      %p271 = scmp.ne.s32.totalorder %s256, %s270
      %p272 = scmp.eq.s32.totalorder %s26, 0
      %p273 = por %p271, %p272
      %s274 = ssub.s32 %s20, %s27
      %p275 = scmp.eq.s32.totalorder %s274, 0
      %s277 = sadd.s32 %s276, 1
      %s278 = scalar_select %p275, %s276, %s277
      %p281 = pneg %p275
      %p282 = scmp.eq.s32.totalorder %s20, 1
      %p283 = por %p281, %p282
      %p284 = scmp.ne.s32.totalorder %s276, %s279
      %p285 = scmp.eq.s32.totalorder %s20, 0
      %p286 = por %p284, %p285
      %p287 = scmp.ne.s32.totalorder %s276, %s279
      %p288 = scmp.eq.s32.totalorder %s25, 1
      %p289 = por %p287, %p288
      %p290 = scmp.ne.s32.totalorder %s279, %s280
      %p291 = scmp.eq.s32.totalorder %s25, 0
      %p292 = por %p290, %p291
      %p293 = scmp.ne.s32.totalorder %s279, %s280
      %p294 = scmp.eq.s32.totalorder %s26, 1
      %p295 = por %p293, %p294
      %p297 = scmp.ne.s32.totalorder %s280, %s296
      %p298 = scmp.eq.s32.totalorder %s26, 0
      %p299 = por %p297, %p298
      %p300 = scmp.le.s32.totalorder 1, %s20
      %p301 = scmp.lt.s32.totalorder %s20, 3
      %p302 = pnand %p300, %p301
      %p303 = pneg %p302
      // Predicated region
      $region9: #{tpu_custom_call.1} parent=5 // pred_check
        _
      $region10: #{tpu_custom_call.1} parent=5 // pred_check_branch
        %305 = sbr.rel (%p302) target = $region12
      $region11: #{tpu_custom_call.1} parent=5 // pred_region
        %s306 = ssub.s32 %s20, 1
        // Predicated region
        $region13: #{tpu_custom_call.1} parent=11 // pred_check
          %p307 = pneg %p119
        $region14: #{tpu_custom_call.1} parent=11 // pred_check_branch
          %309 = sbr.rel (%p307) target = $region16
        $region15: #{tpu_custom_call.1} parent=11 // pred_region
          _
        $region16: #{tpu_custom_call.1} parent=11 // pred_fallthru
          _
        // Predicated region
        $region17: #{tpu_custom_call.1} parent=11 // pred_check
          %p310 = pneg %p140
        $region18: #{tpu_custom_call.1} parent=11 // pred_check_branch
          %312 = sbr.rel (%p310) target = $region20
        $region19: #{tpu_custom_call.1} parent=11 // pred_region
          _
        $region20: #{tpu_custom_call.1} parent=11 // pred_fallthru
          _
        // Predicated region
        $region21: #{tpu_custom_call.1} parent=11 // pred_check
          %p313 = pneg %p161
        $region22: #{tpu_custom_call.1} parent=11 // pred_check_branch
          %315 = sbr.rel (%p313) target = $region24
        $region23: #{tpu_custom_call.1} parent=11 // pred_region
          _
        $region24: #{tpu_custom_call.1} parent=11 // pred_fallthru
          _
        // Predicated region
        $region25: #{tpu_custom_call.1} parent=11 // pred_check
          %p316 = pneg %p182
        $region26: #{tpu_custom_call.1} parent=11 // pred_check_branch
          %318 = sbr.rel (%p316) target = $region28
        $region27: #{tpu_custom_call.1} parent=11 // pred_region
          _
        $region28: #{tpu_custom_call.1} parent=11 // pred_fallthru
          _
        // Predicated region
        $region29: #{tpu_custom_call.1} parent=11 // pred_check
          %p319 = pneg %p203
        $region30: #{tpu_custom_call.1} parent=11 // pred_check_branch
          %321 = sbr.rel (%p319) target = $region32
        $region31: #{tpu_custom_call.1} parent=11 // pred_region
          _
        $region32: #{tpu_custom_call.1} parent=11 // pred_fallthru
          _
        // Predicated region
        $region33: #{tpu_custom_call.1} parent=11 // pred_check
          %p322 = pneg %p224
        $region34: #{tpu_custom_call.1} parent=11 // pred_check_branch
          %324 = sbr.rel (%p322) target = $region36
        $region35: #{tpu_custom_call.1} parent=11 // pred_region
          _
        $region36: #{tpu_custom_call.1} parent=11 // pred_fallthru
          _
        // Predicated region
        $region37: #{tpu_custom_call.1} parent=11 // pred_check
          %p325 = pneg %p245
        $region38: #{tpu_custom_call.1} parent=11 // pred_check_branch
          %327 = sbr.rel (%p325) target = $region40
        $region39: #{tpu_custom_call.1} parent=11 // pred_region
          _
        $region40: #{tpu_custom_call.1} parent=11 // pred_fallthru
          _
        // Predicated region
        $region41: #{tpu_custom_call.1} parent=11 // pred_check
          %p328 = pneg %p266
        $region42: #{tpu_custom_call.1} parent=11 // pred_check_branch
          %330 = sbr.rel (%p328) target = $region44
        $region43: #{tpu_custom_call.1} parent=11 // pred_region
          _
        $region44: #{tpu_custom_call.1} parent=11 // pred_fallthru
          _
      $region12: #{tpu_custom_call.1} parent=5 // pred_fallthru
        _
      %p331 = scmp.lt.s32.totalorder %s20, 2
      // Predicated region
      $region45: #{tpu_custom_call.1} parent=5 // pred_check
        %p332 = pneg %p331
      $region46: #{tpu_custom_call.1} parent=5 // pred_check_branch
        %334 = sbr.rel (%p332) target = $region48
      $region47: #{tpu_custom_call.1} parent=5 // pred_region
        // Predicated region
        $region49: #{tpu_custom_call.1} parent=47 // pred_check
          %p335 = pneg %p40
        $region50: #{tpu_custom_call.1} parent=47 // pred_check_branch
          %337 = sbr.rel (%p335) target = $region52
        $region51: #{tpu_custom_call.1} parent=47 // pred_region
          %p338 = scmp.lt.s32.totalorder %s20, 1
          %s339 = scalar_select %p338, %s20, 1
          %s340 = smul.addr %s339, 2
          %s341 = smul.addr %s340, 4
          %s342 = scalar_lea.vmem %s0, %s341
        $region52: #{tpu_custom_call.1} parent=47 // pred_fallthru
          _
        // Predicated region
        $region53: #{tpu_custom_call.1} parent=47 // pred_check
          %p343 = pneg %p66
        $region54: #{tpu_custom_call.1} parent=47 // pred_check_branch
          %345 = sbr.rel (%p343) target = $region56
        $region55: #{tpu_custom_call.1} parent=47 // pred_region
          %p346 = scmp.lt.s32.totalorder %s20, 1
          %s347 = scalar_select %p346, %s20, 1
          %s348 = smul.addr %s347, 2
          %s349 = smul.addr %s348, 8
          %s350 = scalar_lea.vmem %s1, %s349
        $region56: #{tpu_custom_call.1} parent=47 // pred_fallthru
          _
        // Predicated region
        $region57: #{tpu_custom_call.1} parent=47 // pred_check
          %p351 = pneg %p92
        $region58: #{tpu_custom_call.1} parent=47 // pred_check_branch
          %353 = sbr.rel (%p351) target = $region60
        $region59: #{tpu_custom_call.1} parent=47 // pred_region
          %p354 = scmp.lt.s32.totalorder %s20, 1
          %s355 = scalar_select %p354, %s20, 1
          %s356 = smul.addr %s355, 2
          %s357 = smul.addr %s356, 4
          %s358 = scalar_lea.vmem %s2, %s357
        $region60: #{tpu_custom_call.1} parent=47 // pred_fallthru
          _
      $region48: #{tpu_custom_call.1} parent=5 // pred_fallthru
        _
      %p359 = scmp.le.s32.totalorder 1, %s20
      %p360 = scmp.lt.s32.totalorder %s20, 3
      %p361 = pnand %p359, %p360
      %p362 = pneg %p361
      // Predicated region
      $region61: #{tpu_custom_call.1} parent=5 // pred_check
        _
      $region62: #{tpu_custom_call.1} parent=5 // pred_check_branch
        %364 = sbr.rel (%p361) target = $region64
      $region63: #{tpu_custom_call.1} parent=5 // pred_region
        %s365 = ssub.s32 %s20, 1
        %p366 = scmp.lt.s32.totalorder %s25, 1
        %s367 = scalar_select %p366, %s25, 1
        %s368 = smul.addr %s367, 2
        %s369 = smul.addr %s368, 4
        %s370 = scalar_lea.vmem %s0, %s369
        %p371 = pneg %p46
        %p372 = pneg %p43
        %p373 = scmp.lt.s32.totalorder %s25, 1
        %s374 = scalar_select %p373, %s25, 1
        %s375 = smul.addr %s374, 2
        %s376 = smul.addr %s375, 8
        %s377 = scalar_lea.vmem %s1, %s376
        %p378 = pneg %p72
        %p379 = pneg %p69
        %p380 = scmp.lt.s32.totalorder %s25, 1
        %s381 = scalar_select %p380, %s25, 1
        %s382 = smul.addr %s381, 2
        %s383 = smul.addr %s382, 4
        %s384 = scalar_lea.vmem %s2, %s383
        %p385 = pneg %p98
        %p386 = pneg %p95
        %p387 = pneg %p119
        %p388 = pneg %p116
        %p389 = pneg %p140
        %p390 = pneg %p137
        %p391 = pneg %p161
        %p392 = pneg %p158
        %p393 = pneg %p182
        %p394 = pneg %p179
        %p395 = pneg %p203
        %p396 = pneg %p200
        %p397 = pneg %p224
        %p398 = pneg %p221
        %p399 = pneg %p245
        %p400 = pneg %p242
        %p401 = pneg %p266
        %p402 = pneg %p263
        %p403 = pneg %p292
        %p404 = pneg %p289
        %s405 = sand.u32 %s279, 1
        %s406 = scalar_lea.sflag [#allocation4], %s405
        %s407 = sand.u32 %s279, 1
        %s408 = smul.addr %s407, 16
        %s409 = scalar_lea.vmem [#allocation3], %s408
        %p410 = scmp.lt.s32.totalorder %s25, 1
        %s411 = scalar_select %p410, %s25, 1
        %s412 = smul.addr %s411, 2
        %s413 = smul.addr %s412, 4
        %s414 = scalar_lea.vmem %s0, %s413
        %p415 = scmp.lt.s32.totalorder %s25, 1
        %s416 = scalar_select %p415, %s25, 1
        %s417 = smul.addr %s416, 2
        %s418 = smul.addr %s417, 8
        %s419 = scalar_lea.vmem %s1, %s418
        %p420 = scmp.lt.s32.totalorder %s25, 1
        %s421 = scalar_select %p420, %s25, 1
        %s422 = smul.addr %s421, 2
        %s423 = smul.addr %s422, 4
        %s424 = scalar_lea.vmem %s2, %s423
        %v426 = vld [vmem:[%s419] sm:$0xff]
        %v427 = vld [vmem:[%s419 + $0x8] sm:$0xff]
        %v428 = vld [vmem:[%s424] sm:$0xf]
        %v429 = vld [vmem:[%s424 + $0x4] sm:$0xf]
        %vm430 = vcmask 261120
        %431 = vst.msk [vmem:[#allocation2] sm:$0xff] %vm430, 0.0
        %432 = vst.msk [vmem:[#allocation2 + $0x8] sm:$0xff] %vm430, 0.0
        %433 = vst.msk [vmem:[#allocation2 + $0x10] sm:$0xff] %vm430, 0.0
        %vm434 = vcmask 257024
        %435 = vst.msk [vmem:[#allocation2 + $0x18] sm:$0xf] %vm434, 0.0
        %v436 = vld [vmem:[%s414] sm:$0xf]
        %v437 = vld [vmem:[%s414 + $0x4] sm:$0xf]
        %v438 = vunpack.c.l.bf16 %v436
        %v439 = vunpack.c.l.bf16 %v437
        %440 = vst.msk [vmem:[#allocation2 + $0x8] sm:$0xff] %vm430, %v438
        %441 = vst.msk [vmem:[#allocation2 + $0x10] sm:$0xff] %vm430, %v439
        %442 = vst.msk [vmem:[%s409] sm:$0xff] %vm430, 0.0
        %443 = vst.msk [vmem:[%s409 + $0x8] sm:$0xff] %vm430, 0.0
        %v444 = vld [vmem:[#allocation2 + $0x7] sm:$0xff]
        %v445 = vld [vmem:[#allocation2 + $0xf] sm:$0xff]
        %v446 = vpack.c.bf16 %v445, %v444
        %v447 = vld [vmem:[#allocation2 + $0x8] sm:$0xff]
        %v448 = vld [vmem:[#allocation2 + $0x10] sm:$0xff]
        %v449 = vpack.c.bf16 %v448, %v447
        %v450 = vld [vmem:[#allocation2 + $0x9] sm:$0xff]
        %v451 = vld [vmem:[#allocation2 + $0x11] sm:$0xff]
        %v452 = vpack.c.bf16 %v451, %v450
        %454 = vrot.lane.b32.xlu0 %v449, 32
        %v455 = vpop.permute.xlu0 %454
        %457 = vrot.lane.b32.xlu0 %v452, 64
        %v458 = vpop.permute.xlu0 %457
        %v461 = vunpack.c.l.b16 %v428
        %v462 = vunpack.c.l.b16 %v429
        %v463 = vpack.c.b16 %v462, %v461
        %464 = vrot.lane.b32.xlu0 %v463, 96
        %v465 = vpop.permute.xlu0 %464
        %v468 = vsel %vm430, %v446, %v455
        %vm469 = vcmask 523264
        %v471 = vsel %vm469, %v468, %v458
        %vm472 = vcmask 785408
        %v474 = vsel %vm472, %v471, %v465
        %v475 = vld [vmem:[%s3] sm:$0xf]
        %v476 = vld [vmem:[%s3 + $0x4] sm:$0xf]
        %v477 = vld [vmem:[%s3 + $0x8] sm:$0xf]
        %v478 = vld [vmem:[%s3 + $0xc] sm:$0xf]
        %v479 = vld [vmem:[%s3 + $0x10] sm:$0xf]
        %v480 = vld [vmem:[%s3 + $0x14] sm:$0xf]
        %v481 = vld [vmem:[%s3 + $0x18] sm:$0xf]
        %v482 = vld [vmem:[%s3 + $0x1c] sm:$0xf]
        %v483 = vld [vmem:[%s3 + $0x20] sm:$0xf]
        %v484 = vld [vmem:[%s3 + $0x24] sm:$0xf]
        %v485 = vld [vmem:[%s3 + $0x28] sm:$0xf]
        %v486 = vld [vmem:[%s3 + $0x2c] sm:$0xf]
        %v487 = vld [vmem:[%s3 + $0x30] sm:$0xf]
        %v488 = vld [vmem:[%s3 + $0x34] sm:$0xf]
        %v489 = vld [vmem:[%s4] sm:$0xf]
        %v490 = vld [vmem:[%s4 + $0x4] sm:$0xf]
        %v491 = vld [vmem:[%s4 + $0x8] sm:$0xf]
        %v492 = vld [vmem:[%s4 + $0xc] sm:$0xf]
        %v493 = vld [vmem:[%s4 + $0x10] sm:$0xf]
        %v494 = vld [vmem:[%s4 + $0x14] sm:$0xf]
        %v495 = vld [vmem:[%s4 + $0x18] sm:$0xf]
        %v496 = vld [vmem:[%s4 + $0x1c] sm:$0xf]
        %v497 = vld [vmem:[%s4 + $0x20] sm:$0xf]
        %v498 = vld [vmem:[%s4 + $0x24] sm:$0xf]
        %v499 = vld [vmem:[%s4 + $0x28] sm:$0xf]
        %v500 = vld [vmem:[%s4 + $0x2c] sm:$0xf]
        %v501 = vld [vmem:[%s4 + $0x30] sm:$0xf]
        %v502 = vld [vmem:[%s4 + $0x34] sm:$0xf]
        %v503 = vld [vmem:[%s5] sm:$0x1]
        %v504 = vlaneseq
        %v505 = vshrl.u32 %v504, 7
        %v506 = vsub.s32 0, %v505
        %v507 = vrot.slane %v503, %v506
        %v522 = vunpack.c.l.b16 %v475
        %v523 = vunpack.c.l.b16 %v476
        %v524 = vunpack.c.l.b16 %v477
        %v525 = vunpack.c.l.b16 %v478
        %v526 = vunpack.c.l.b16 %v479
        %v527 = vunpack.c.l.b16 %v480
        %v528 = vunpack.c.l.b16 %v481
        %v529 = vunpack.c.l.b16 %v482
        %v530 = vunpack.c.l.b16 %v483
        %v531 = vunpack.c.l.b16 %v484
        %v532 = vunpack.c.l.b16 %v485
        %v533 = vunpack.c.l.b16 %v486
        %v534 = vunpack.c.l.b16 %v487
        %v535 = vunpack.c.l.b16 %v488
        %v536 = vpack.c.b16 %v523, %v522
        %v537 = vpack.c.b16 %v525, %v524
        %v538 = vpack.c.b16 %v527, %v526
        %v539 = vpack.c.b16 %v529, %v528
        %v540 = vpack.c.b16 %v531, %v530
        %v541 = vpack.c.b16 %v533, %v532
        %v542 = vpack.c.b16 %v535, %v534
        %vm550 = vcmask 916480
        %v551 = vsel %vm550, %v474, 0
        %553 = vmatprep.subr.bf16.mxu0 0
        %554 = vmatpush1.bf16.msra.mxu0 %v536
        %555 = vmatprep.subr.bf16.mxu0 0
        %556 = vmatpush1.bf16.msra.mxu0 %v537
        %557 = vmatprep.subr.bf16.mxu0 0
        %558 = vmatpush1.bf16.msra.mxu0 %v538
        %559 = vmatprep.subr.bf16.mxu0 0
        %560 = vmatpush1.bf16.msra.mxu0 %v539
        %561 = vmatprep.subr.bf16.mxu0 0
        %562 = vmatpush1.bf16.msra.mxu0 %v540
        %563 = vmatprep.subr.bf16.mxu0 0
        %564 = vmatpush1.bf16.msra.mxu0 %v541
        %565 = vmatprep.subr.bf16.mxu0 0
        %566 = vmatpush1.bf16.msra.mxu0 %v542
        %567 = vmatprep.subr.bf16.mxu0 0
        %568 = vmatpush1.bf16.msra.mxu0 0
        %569 = vmatprep.subr.bf16.mxu0 0
        %570 = vmatpush1.bf16.msra.mxu0 0
        %571 = vmatprep.subr.bf16.mxu0 0
        %572 = vmatpush1.bf16.msra.mxu0 0
        %573 = vmatprep.subr.bf16.mxu0 0
        %574 = vmatpush1.bf16.msra.mxu0 0
        %575 = vmatprep.subr.bf16.mxu0 0
        %576 = vmatpush1.bf16.msra.mxu0 0
        %577 = vmatprep.subr.bf16.mxu0 0
        %578 = vmatpush1.bf16.msra.mxu0 0
        %579 = vmatprep.subr.bf16.mxu0 0
        %580 = vmatpush1.bf16.msra.mxu0 0
        %581 = vmatprep.subr.bf16.mxu0 0
        %582 = vmatpush1.bf16.msra.mxu0 0
        %583 = vmatprep.subr.bf16.mxu0 0
        %584 = vmatpush1.bf16.msra.mxu0 0
        %585 = vmatprep.mubr.bf16.mxu0 0
        %586 = vmatmul.mubr.bf16.gmra.mrb[0].mxu0 %v551
        %v587 = vpop.f32.mrb[0].mxu0
        %v588 = vadd.f32 %v507, %v587
        %v589 = vpop.f32.mrb[0].mxu0
        %v590 = vpop.f32.mrb[0].mxu0
        %v591 = vadd.f32 %v507, %v590
        %v592 = vpop.f32.mrb[0].mxu0
        %593 = vdwg.mxu0
        %v594 = vld [vmem:[%s6] sm:$0x1]
        %v595 = vlaneseq
        %v596 = vshrl.u32 %v595, 7
        %v597 = vsub.s32 0, %v596
        %v598 = vrot.slane %v594, %v597
        %v613 = vunpack.c.l.b16 %v489
        %v614 = vunpack.c.l.b16 %v490
        %v615 = vunpack.c.l.b16 %v491
        %v616 = vunpack.c.l.b16 %v492
        %v617 = vunpack.c.l.b16 %v493
        %v618 = vunpack.c.l.b16 %v494
        %v619 = vunpack.c.l.b16 %v495
        %v620 = vunpack.c.l.b16 %v496
        %v621 = vunpack.c.l.b16 %v497
        %v622 = vunpack.c.l.b16 %v498
        %v623 = vunpack.c.l.b16 %v499
        %v624 = vunpack.c.l.b16 %v500
        %v625 = vunpack.c.l.b16 %v501
        %v626 = vunpack.c.l.b16 %v502
        %v627 = vpack.c.b16 %v614, %v613
        %v628 = vpack.c.b16 %v616, %v615
        %v629 = vpack.c.b16 %v618, %v617
        %v630 = vpack.c.b16 %v620, %v619
        %v631 = vpack.c.b16 %v622, %v621
        %v632 = vpack.c.b16 %v624, %v623
        %v633 = vpack.c.b16 %v626, %v625
        %641 = vmatprep.subr.bf16.mxu0 0
        %642 = vmatpush1.bf16.msra.mxu0 %v627
        %643 = vmatprep.subr.bf16.mxu0 0
        %644 = vmatpush1.bf16.msra.mxu0 %v628
        %645 = vmatprep.subr.bf16.mxu0 0
        %646 = vmatpush1.bf16.msra.mxu0 %v629
        %647 = vmatprep.subr.bf16.mxu0 0
        %648 = vmatpush1.bf16.msra.mxu0 %v630
        %649 = vmatprep.subr.bf16.mxu0 0
        %650 = vmatpush1.bf16.msra.mxu0 %v631
        %651 = vmatprep.subr.bf16.mxu0 0
        %652 = vmatpush1.bf16.msra.mxu0 %v632
        %653 = vmatprep.subr.bf16.mxu0 0
        %654 = vmatpush1.bf16.msra.mxu0 %v633
        %655 = vmatprep.subr.bf16.mxu0 0
        %656 = vmatpush1.bf16.msra.mxu0 0
        %657 = vmatprep.subr.bf16.mxu0 0
        %658 = vmatpush1.bf16.msra.mxu0 0
        %659 = vmatprep.subr.bf16.mxu0 0
        %660 = vmatpush1.bf16.msra.mxu0 0
        %661 = vmatprep.subr.bf16.mxu0 0
        %662 = vmatpush1.bf16.msra.mxu0 0
        %663 = vmatprep.subr.bf16.mxu0 0
        %664 = vmatpush1.bf16.msra.mxu0 0
        %665 = vmatprep.subr.bf16.mxu0 0
        %666 = vmatpush1.bf16.msra.mxu0 0
        %667 = vmatprep.subr.bf16.mxu0 0
        %668 = vmatpush1.bf16.msra.mxu0 0
        %669 = vmatprep.subr.bf16.mxu0 0
        %670 = vmatpush1.bf16.msra.mxu0 0
        %671 = vmatprep.subr.bf16.mxu0 0
        %672 = vmatpush1.bf16.msra.mxu0 0
        %673 = vmatprep.mubr.bf16.mxu0 0
        %674 = vmatmul.mubr.bf16.gmra.mrb[0].mxu0 %v551
        %v675 = vpop.f32.mrb[0].mxu0
        %v676 = vadd.f32 %v598, %v675
        %v677 = vpop.f32.mrb[0].mxu0
        %v678 = vpop.f32.mrb[0].mxu0
        %v679 = vadd.f32 %v598, %v678
        %v680 = vpop.f32.mrb[0].mxu0
        %681 = vdwg.mxu0
        %v682 = vtanh.pop %v588
        %v683 = vtanh.pop %v591
        %v684 = vxor.u32 %v676, 2147483648
        %v685 = vxor.u32 %v679, 2147483648
        %v686 = vmul.f32 %v684, 1.442695
        %v687 = vpow.pop %v686
        %v688 = vmul.f32 %v685, 1.442695
        %v689 = vpow.pop %v688
        %v690 = vadd.f32 %v687, 1.0
        %v691 = vadd.f32 %v689, 1.0
        %v692 = vrcp.pop %v690
        %v693 = vmul.f32 1.0, %v692
        %v694 = vrcp.pop %v691
        %v695 = vmul.f32 1.0, %v694
        %v696 = vmul.f32 %v682, %v693
        %v697 = vmul.f32 %v683, %v695
        %v698 = vpack.c.bf16 %v697, %v696
        %v699 = vld [vmem:[%s8] sm:$0xf]
        %v700 = vld [vmem:[%s8 + $0x4] sm:$0xf]
        %v701 = vld [vmem:[%s8 + $0x8] sm:$0xf]
        %v702 = vld [vmem:[%s8 + $0xc] sm:$0xf]
        %v707 = vunpack.c.l.b16 %v699
        %v708 = vunpack.c.l.b16 %v700
        %v709 = vunpack.c.l.b16 %v701
        %v710 = vunpack.c.l.b16 %v702
        %v711 = vpack.c.b16 %v708, %v707
        %v712 = vpack.c.b16 %v710, %v709
        %v716 = vsel %vm430, %v698, 0
        %718 = vmatprep.subr.bf16.mxu0 0
        %719 = vmatpush1.bf16.msra.mxu0 %v711
        %720 = vmatprep.subr.bf16.mxu0 0
        %721 = vmatpush1.bf16.msra.mxu0 %v712
        %722 = vmatprep.subr.bf16.mxu0 0
        %723 = vmatpush1.bf16.msra.mxu0 0
        %724 = vmatprep.subr.bf16.mxu0 0
        %725 = vmatpush1.bf16.msra.mxu0 0
        %726 = vmatprep.subr.bf16.mxu0 0
        %727 = vmatpush1.bf16.msra.mxu0 0
        %728 = vmatprep.subr.bf16.mxu0 0
        %729 = vmatpush1.bf16.msra.mxu0 0
        %730 = vmatprep.subr.bf16.mxu0 0
        %731 = vmatpush1.bf16.msra.mxu0 0
        %732 = vmatprep.subr.bf16.mxu0 0
        %733 = vmatpush1.bf16.msra.mxu0 0
        %734 = vmatprep.subr.bf16.mxu0 0
        %735 = vmatpush1.bf16.msra.mxu0 0
        %736 = vmatprep.subr.bf16.mxu0 0
        %737 = vmatpush1.bf16.msra.mxu0 0
        %738 = vmatprep.subr.bf16.mxu0 0
        %739 = vmatpush1.bf16.msra.mxu0 0
        %740 = vmatprep.subr.bf16.mxu0 0
        %741 = vmatpush1.bf16.msra.mxu0 0
        %742 = vmatprep.subr.bf16.mxu0 0
        %743 = vmatpush1.bf16.msra.mxu0 0
        %744 = vmatprep.subr.bf16.mxu0 0
        %745 = vmatpush1.bf16.msra.mxu0 0
        %746 = vmatprep.subr.bf16.mxu0 0
        %747 = vmatpush1.bf16.msra.mxu0 0
        %748 = vmatprep.subr.bf16.mxu0 0
        %749 = vmatpush1.bf16.msra.mxu0 0
        %750 = vmatprep.mubr.bf16.mxu0 0
        %751 = vmatmul.mubr.bf16.gmra.mrb[0].mxu0 %v716
        %v752 = vpop.f32.mrb[0].mxu0
        %v753 = vadd.f32 0.0, %v752
        %v754 = vpop.f32.mrb[0].mxu0
        %v755 = vpop.f32.mrb[0].mxu0
        %v756 = vadd.f32 0.0, %v755
        %v757 = vpop.f32.mrb[0].mxu0
        %758 = vdwg.mxu0
        %v759 = vld [vmem:[%s409] sm:$0xff]
        %v760 = vld [vmem:[%s409 + $0x8] sm:$0xff]
        %v761 = vadd.f32 %v759, %v753
        %v762 = vadd.f32 %v760, %v756
        %v763 = vld [vmem:[%s10] sm:$0x1]
        %v764 = vlaneseq
        %v765 = vshrl.u32 %v764, 7
        %v766 = vsub.s32 0, %v765
        %v767 = vrot.slane %v763, %v766
        %v768 = vadd.f32 %v761, %v767
        %v769 = vadd.f32 %v762, %v767
        %770 = vst.msk [vmem:[%s409] sm:$0xff] %vm430, %v768
        %771 = vst.msk [vmem:[%s409 + $0x8] sm:$0xff] %vm430, %v769
        %v772 = vld [vmem:[%s7] sm:$0xf]
        %v773 = vld [vmem:[%s7 + $0x4] sm:$0xf]
        %v774 = vld [vmem:[%s7 + $0x8] sm:$0xf]
        %v775 = vld [vmem:[%s7 + $0xc] sm:$0xf]
        %v776 = vld [vmem:[%s9] sm:$0x1]
        %v777 = vlaneseq
        %v778 = vshrl.u32 %v777, 7
        %v779 = vsub.s32 0, %v778
        %v780 = vrot.slane %v776, %v779
        %v785 = vunpack.c.l.b16 %v772
        %v786 = vunpack.c.l.b16 %v773
        %v787 = vunpack.c.l.b16 %v774
        %v788 = vunpack.c.l.b16 %v775
        %v789 = vpack.c.b16 %v786, %v785
        %v790 = vpack.c.b16 %v788, %v787
        %793 = vmatprep.subr.bf16.mxu0 0
        %794 = vmatpush1.bf16.msra.mxu0 %v789
        %795 = vmatprep.subr.bf16.mxu0 0
        %796 = vmatpush1.bf16.msra.mxu0 %v790
        %797 = vmatprep.subr.bf16.mxu0 0
        %798 = vmatpush1.bf16.msra.mxu0 0
        %799 = vmatprep.subr.bf16.mxu0 0
        %800 = vmatpush1.bf16.msra.mxu0 0
        %801 = vmatprep.subr.bf16.mxu0 0
        %802 = vmatpush1.bf16.msra.mxu0 0
        %803 = vmatprep.subr.bf16.mxu0 0
        %804 = vmatpush1.bf16.msra.mxu0 0
        %805 = vmatprep.subr.bf16.mxu0 0
        %806 = vmatpush1.bf16.msra.mxu0 0
        %807 = vmatprep.subr.bf16.mxu0 0
        %808 = vmatpush1.bf16.msra.mxu0 0
        %809 = vmatprep.subr.bf16.mxu0 0
        %810 = vmatpush1.bf16.msra.mxu0 0
        %811 = vmatprep.subr.bf16.mxu0 0
        %812 = vmatpush1.bf16.msra.mxu0 0
        %813 = vmatprep.subr.bf16.mxu0 0
        %814 = vmatpush1.bf16.msra.mxu0 0
        %815 = vmatprep.subr.bf16.mxu0 0
        %816 = vmatpush1.bf16.msra.mxu0 0
        %817 = vmatprep.subr.bf16.mxu0 0
        %818 = vmatpush1.bf16.msra.mxu0 0
        %819 = vmatprep.subr.bf16.mxu0 0
        %820 = vmatpush1.bf16.msra.mxu0 0
        %821 = vmatprep.subr.bf16.mxu0 0
        %822 = vmatpush1.bf16.msra.mxu0 0
        %823 = vmatprep.subr.bf16.mxu0 0
        %824 = vmatpush1.bf16.msra.mxu0 0
        %825 = vmatprep.mubr.bf16.mxu0 0
        %826 = vmatmul.mubr.bf16.gmra.mrb[0].mxu0 %v716
        %v827 = vpop.f32.mrb[0].mxu0
        %v828 = vadd.f32 %v780, %v827
        %v829 = vpop.f32.mrb[0].mxu0
        %v830 = vpop.f32.mrb[0].mxu0
        %v831 = vadd.f32 %v780, %v830
        %v832 = vpop.f32.mrb[0].mxu0
        %833 = vdwg.mxu0
        %v834 = vld [vmem:[#allocation2 + $0x8] sm:$0xff]
        %v835 = vld [vmem:[#allocation2 + $0x10] sm:$0xff]
        %v836 = vadd.f32 %v834, %v828
        %v837 = vadd.f32 %v835, %v831
        %839 = vset.pattern.permute.xlu0 0
        %840 = vperm.xlu0 %839, %v426
        %v841 = vpop.permute.xlu0 %840
        %844 = vset.pattern.permute.xlu0 0
        %845 = vperm.xlu0 %844, %v427
        %v846 = vpop.permute.xlu0 %845
        %v848 = vmul.f32 %v836, %v841
        %v849 = vmul.f32 %v837, %v846
        %850 = vst.msk [vmem:[#allocation2 + $0x8] sm:$0xff] %vm430, %v848
        %851 = vst.msk [vmem:[#allocation2 + $0x10] sm:$0xff] %vm430, %v849
        %v852 = vld [vmem:[#allocation2 + $0x6] sm:$0xff]
        %v853 = vld [vmem:[#allocation2 + $0xe] sm:$0xff]
        %v854 = vpack.c.bf16 %v853, %v852
        %v855 = vld [vmem:[#allocation2 + $0x8] sm:$0xff]
        %v856 = vld [vmem:[#allocation2 + $0x10] sm:$0xff]
        %v857 = vpack.c.bf16 %v856, %v855
        %v858 = vld [vmem:[#allocation2 + $0xa] sm:$0xff]
        %v859 = vld [vmem:[#allocation2 + $0x12] sm:$0xff]
        %v860 = vpack.c.bf16 %v859, %v858
        %862 = vrot.lane.b32.xlu0 %v857, 32
        %v863 = vpop.permute.xlu0 %862
        %865 = vrot.lane.b32.xlu0 %v860, 64
        %v866 = vpop.permute.xlu0 %865
        %v869 = vsel %vm430, %v854, %v863
        %v871 = vsel %vm469, %v869, %v866
        %v872 = vsel %vm472, %v871, %v465
        %s873 = scalar_lea.vmem %s3, 56
        %v874 = vld [vmem:[%s873] sm:$0xf]
        %v875 = vld [vmem:[%s873 + $0x4] sm:$0xf]
        %v876 = vld [vmem:[%s873 + $0x8] sm:$0xf]
        %v877 = vld [vmem:[%s873 + $0xc] sm:$0xf]
        %v878 = vld [vmem:[%s873 + $0x10] sm:$0xf]
        %v879 = vld [vmem:[%s873 + $0x14] sm:$0xf]
        %v880 = vld [vmem:[%s873 + $0x18] sm:$0xf]
        %v881 = vld [vmem:[%s873 + $0x1c] sm:$0xf]
        %v882 = vld [vmem:[%s873 + $0x20] sm:$0xf]
        %v883 = vld [vmem:[%s873 + $0x24] sm:$0xf]
        %v884 = vld [vmem:[%s873 + $0x28] sm:$0xf]
        %v885 = vld [vmem:[%s873 + $0x2c] sm:$0xf]
        %v886 = vld [vmem:[%s873 + $0x30] sm:$0xf]
        %v887 = vld [vmem:[%s873 + $0x34] sm:$0xf]
        %s888 = scalar_lea.vmem %s4, 56
        %v889 = vld [vmem:[%s888] sm:$0xf]
        %v890 = vld [vmem:[%s888 + $0x4] sm:$0xf]
        %v891 = vld [vmem:[%s888 + $0x8] sm:$0xf]
        %v892 = vld [vmem:[%s888 + $0xc] sm:$0xf]
        %v893 = vld [vmem:[%s888 + $0x10] sm:$0xf]
        %v894 = vld [vmem:[%s888 + $0x14] sm:$0xf]
        %v895 = vld [vmem:[%s888 + $0x18] sm:$0xf]
        %v896 = vld [vmem:[%s888 + $0x1c] sm:$0xf]
        %v897 = vld [vmem:[%s888 + $0x20] sm:$0xf]
        %v898 = vld [vmem:[%s888 + $0x24] sm:$0xf]
        %v899 = vld [vmem:[%s888 + $0x28] sm:$0xf]
        %v900 = vld [vmem:[%s888 + $0x2c] sm:$0xf]
        %v901 = vld [vmem:[%s888 + $0x30] sm:$0xf]
        %v902 = vld [vmem:[%s888 + $0x34] sm:$0xf]
        %v903 = vld [vmem:[%s5 + $0x1] sm:$0x1]
        %v904 = vlaneseq
        %v905 = vshrl.u32 %v904, 7
        %v906 = vsub.s32 0, %v905
        %v907 = vrot.slane %v903, %v906
        %v922 = vunpack.c.l.b16 %v874
        %v923 = vunpack.c.l.b16 %v875
        %v924 = vunpack.c.l.b16 %v876
        %v925 = vunpack.c.l.b16 %v877
        %v926 = vunpack.c.l.b16 %v878
        %v927 = vunpack.c.l.b16 %v879
        %v928 = vunpack.c.l.b16 %v880
        %v929 = vunpack.c.l.b16 %v881
        %v930 = vunpack.c.l.b16 %v882
        %v931 = vunpack.c.l.b16 %v883
        %v932 = vunpack.c.l.b16 %v884
        %v933 = vunpack.c.l.b16 %v885
        %v934 = vunpack.c.l.b16 %v886
        %v935 = vunpack.c.l.b16 %v887
        %v936 = vpack.c.b16 %v923, %v922
        %v937 = vpack.c.b16 %v925, %v924
        %v938 = vpack.c.b16 %v927, %v926
        %v939 = vpack.c.b16 %v929, %v928
        %v940 = vpack.c.b16 %v931, %v930
        %v941 = vpack.c.b16 %v933, %v932
        %v942 = vpack.c.b16 %v935, %v934
        %v950 = vsel %vm550, %v872, 0
        %952 = vmatprep.subr.bf16.mxu0 0
        %953 = vmatpush1.bf16.msra.mxu0 %v936
        %954 = vmatprep.subr.bf16.mxu0 0
        %955 = vmatpush1.bf16.msra.mxu0 %v937
        %956 = vmatprep.subr.bf16.mxu0 0
        %957 = vmatpush1.bf16.msra.mxu0 %v938
        %958 = vmatprep.subr.bf16.mxu0 0
        %959 = vmatpush1.bf16.msra.mxu0 %v939
        %960 = vmatprep.subr.bf16.mxu0 0
        %961 = vmatpush1.bf16.msra.mxu0 %v940
        %962 = vmatprep.subr.bf16.mxu0 0
        %963 = vmatpush1.bf16.msra.mxu0 %v941
        %964 = vmatprep.subr.bf16.mxu0 0
        %965 = vmatpush1.bf16.msra.mxu0 %v942
        %966 = vmatprep.subr.bf16.mxu0 0
        %967 = vmatpush1.bf16.msra.mxu0 0
        %968 = vmatprep.subr.bf16.mxu0 0
        %969 = vmatpush1.bf16.msra.mxu0 0
        %970 = vmatprep.subr.bf16.mxu0 0
        %971 = vmatpush1.bf16.msra.mxu0 0
        %972 = vmatprep.subr.bf16.mxu0 0
        %973 = vmatpush1.bf16.msra.mxu0 0
        %974 = vmatprep.subr.bf16.mxu0 0
        %975 = vmatpush1.bf16.msra.mxu0 0
        %976 = vmatprep.subr.bf16.mxu0 0
        %977 = vmatpush1.bf16.msra.mxu0 0
        %978 = vmatprep.subr.bf16.mxu0 0
        %979 = vmatpush1.bf16.msra.mxu0 0
        %980 = vmatprep.subr.bf16.mxu0 0
        %981 = vmatpush1.bf16.msra.mxu0 0
        %982 = vmatprep.subr.bf16.mxu0 0
        %983 = vmatpush1.bf16.msra.mxu0 0
        %984 = vmatprep.mubr.bf16.mxu0 0
        %985 = vmatmul.mubr.bf16.gmra.mrb[0].mxu0 %v950
        %v986 = vpop.f32.mrb[0].mxu0
        %v987 = vadd.f32 %v907, %v986
        %v988 = vpop.f32.mrb[0].mxu0
        %v989 = vpop.f32.mrb[0].mxu0
        %v990 = vadd.f32 %v907, %v989
        %v991 = vpop.f32.mrb[0].mxu0
        %992 = vdwg.mxu0
        %v993 = vld [vmem:[%s6 + $0x1] sm:$0x1]
        %v994 = vlaneseq
        %v995 = vshrl.u32 %v994, 7
        %v996 = vsub.s32 0, %v995
        %v997 = vrot.slane %v993, %v996
        %v1012 = vunpack.c.l.b16 %v889
        %v1013 = vunpack.c.l.b16 %v890
        %v1014 = vunpack.c.l.b16 %v891
        %v1015 = vunpack.c.l.b16 %v892
        %v1016 = vunpack.c.l.b16 %v893
        %v1017 = vunpack.c.l.b16 %v894
        %v1018 = vunpack.c.l.b16 %v895
        %v1019 = vunpack.c.l.b16 %v896
        %v1020 = vunpack.c.l.b16 %v897
        %v1021 = vunpack.c.l.b16 %v898
        %v1022 = vunpack.c.l.b16 %v899
        %v1023 = vunpack.c.l.b16 %v900
        %v1024 = vunpack.c.l.b16 %v901
        %v1025 = vunpack.c.l.b16 %v902
        %v1026 = vpack.c.b16 %v1013, %v1012
        %v1027 = vpack.c.b16 %v1015, %v1014
        %v1028 = vpack.c.b16 %v1017, %v1016
        %v1029 = vpack.c.b16 %v1019, %v1018
        %v1030 = vpack.c.b16 %v1021, %v1020
        %v1031 = vpack.c.b16 %v1023, %v1022
        %v1032 = vpack.c.b16 %v1025, %v1024
        %1040 = vmatprep.subr.bf16.mxu0 0
        %1041 = vmatpush1.bf16.msra.mxu0 %v1026
        %1042 = vmatprep.subr.bf16.mxu0 0
        %1043 = vmatpush1.bf16.msra.mxu0 %v1027
        %1044 = vmatprep.subr.bf16.mxu0 0
        %1045 = vmatpush1.bf16.msra.mxu0 %v1028
        %1046 = vmatprep.subr.bf16.mxu0 0
        %1047 = vmatpush1.bf16.msra.mxu0 %v1029
        %1048 = vmatprep.subr.bf16.mxu0 0
        %1049 = vmatpush1.bf16.msra.mxu0 %v1030
        %1050 = vmatprep.subr.bf16.mxu0 0
        %1051 = vmatpush1.bf16.msra.mxu0 %v1031
        %1052 = vmatprep.subr.bf16.mxu0 0
        %1053 = vmatpush1.bf16.msra.mxu0 %v1032
        %1054 = vmatprep.subr.bf16.mxu0 0
        %1055 = vmatpush1.bf16.msra.mxu0 0
        %1056 = vmatprep.subr.bf16.mxu0 0
        %1057 = vmatpush1.bf16.msra.mxu0 0
        %1058 = vmatprep.subr.bf16.mxu0 0
        %1059 = vmatpush1.bf16.msra.mxu0 0
        %1060 = vmatprep.subr.bf16.mxu0 0
        %1061 = vmatpush1.bf16.msra.mxu0 0
        %1062 = vmatprep.subr.bf16.mxu0 0
        %1063 = vmatpush1.bf16.msra.mxu0 0
        %1064 = vmatprep.subr.bf16.mxu0 0
        %1065 = vmatpush1.bf16.msra.mxu0 0
        %1066 = vmatprep.subr.bf16.mxu0 0
        %1067 = vmatpush1.bf16.msra.mxu0 0
        %1068 = vmatprep.subr.bf16.mxu0 0
        %1069 = vmatpush1.bf16.msra.mxu0 0
        %1070 = vmatprep.subr.bf16.mxu0 0
        %1071 = vmatpush1.bf16.msra.mxu0 0
        %1072 = vmatprep.mubr.bf16.mxu0 0
        %1073 = vmatmul.mubr.bf16.gmra.mrb[0].mxu0 %v950
        %v1074 = vpop.f32.mrb[0].mxu0
        %v1075 = vadd.f32 %v997, %v1074
        %v1076 = vpop.f32.mrb[0].mxu0
        %v1077 = vpop.f32.mrb[0].mxu0
        %v1078 = vadd.f32 %v997, %v1077
        %v1079 = vpop.f32.mrb[0].mxu0
        %1080 = vdwg.mxu0
        %v1081 = vtanh.pop %v987
        %v1082 = vtanh.pop %v990
        %v1083 = vxor.u32 %v1075, 2147483648
        %v1084 = vxor.u32 %v1078, 2147483648
        %v1085 = vmul.f32 %v1083, 1.442695
        %v1086 = vpow.pop %v1085
        %v1087 = vmul.f32 %v1084, 1.442695
        %v1088 = vpow.pop %v1087
        %v1089 = vadd.f32 %v1086, 1.0
        %v1090 = vadd.f32 %v1088, 1.0
        %v1091 = vrcp.pop %v1089
        %v1092 = vmul.f32 1.0, %v1091
        %v1093 = vrcp.pop %v1090
        %v1094 = vmul.f32 1.0, %v1093
        %v1095 = vmul.f32 %v1081, %v1092
        %v1096 = vmul.f32 %v1082, %v1094
        %v1097 = vpack.c.bf16 %v1096, %v1095
        %s1098 = scalar_lea.vmem %s8, 16
        %v1099 = vld [vmem:[%s1098] sm:$0xf]
        %v1100 = vld [vmem:[%s1098 + $0x4] sm:$0xf]
        %v1101 = vld [vmem:[%s1098 + $0x8] sm:$0xf]
        %v1102 = vld [vmem:[%s1098 + $0xc] sm:$0xf]
        %v1107 = vunpack.c.l.b16 %v1099
        %v1108 = vunpack.c.l.b16 %v1100
        %v1109 = vunpack.c.l.b16 %v1101
        %v1110 = vunpack.c.l.b16 %v1102
        %v1111 = vpack.c.b16 %v1108, %v1107
        %v1112 = vpack.c.b16 %v1110, %v1109
        %v1116 = vsel %vm430, %v1097, 0
        %1118 = vmatprep.subr.bf16.mxu0 0
        %1119 = vmatpush1.bf16.msra.mxu0 %v1111
        %1120 = vmatprep.subr.bf16.mxu0 0
        %1121 = vmatpush1.bf16.msra.mxu0 %v1112
        %1122 = vmatprep.subr.bf16.mxu0 0
        %1123 = vmatpush1.bf16.msra.mxu0 0
        %1124 = vmatprep.subr.bf16.mxu0 0
        %1125 = vmatpush1.bf16.msra.mxu0 0
        %1126 = vmatprep.subr.bf16.mxu0 0
        %1127 = vmatpush1.bf16.msra.mxu0 0
        %1128 = vmatprep.subr.bf16.mxu0 0
        %1129 = vmatpush1.bf16.msra.mxu0 0
        %1130 = vmatprep.subr.bf16.mxu0 0
        %1131 = vmatpush1.bf16.msra.mxu0 0
        %1132 = vmatprep.subr.bf16.mxu0 0
        %1133 = vmatpush1.bf16.msra.mxu0 0
        %1134 = vmatprep.subr.bf16.mxu0 0
        %1135 = vmatpush1.bf16.msra.mxu0 0
        %1136 = vmatprep.subr.bf16.mxu0 0
        %1137 = vmatpush1.bf16.msra.mxu0 0
        %1138 = vmatprep.subr.bf16.mxu0 0
        %1139 = vmatpush1.bf16.msra.mxu0 0
        %1140 = vmatprep.subr.bf16.mxu0 0
        %1141 = vmatpush1.bf16.msra.mxu0 0
        %1142 = vmatprep.subr.bf16.mxu0 0
        %1143 = vmatpush1.bf16.msra.mxu0 0
        %1144 = vmatprep.subr.bf16.mxu0 0
        %1145 = vmatpush1.bf16.msra.mxu0 0
        %1146 = vmatprep.subr.bf16.mxu0 0
        %1147 = vmatpush1.bf16.msra.mxu0 0
        %1148 = vmatprep.subr.bf16.mxu0 0
        %1149 = vmatpush1.bf16.msra.mxu0 0
        %1150 = vmatprep.mubr.bf16.mxu0 0
        %1151 = vmatmul.mubr.bf16.gmra.mrb[0].mxu0 %v1116
        %v1152 = vpop.f32.mrb[0].mxu0
        %v1153 = vadd.f32 0.0, %v1152
        %v1154 = vpop.f32.mrb[0].mxu0
        %v1155 = vpop.f32.mrb[0].mxu0
        %v1156 = vadd.f32 0.0, %v1155
        %v1157 = vpop.f32.mrb[0].mxu0
        %1158 = vdwg.mxu0
        %v1159 = vld [vmem:[%s409] sm:$0xff]
        %v1160 = vld [vmem:[%s409 + $0x8] sm:$0xff]
        %v1161 = vadd.f32 %v1159, %v1153
        %v1162 = vadd.f32 %v1160, %v1156
        %v1163 = vld [vmem:[%s10 + $0x1] sm:$0x1]
        %v1164 = vlaneseq
        %v1165 = vshrl.u32 %v1164, 7
        %v1166 = vsub.s32 0, %v1165
        %v1167 = vrot.slane %v1163, %v1166
        %v1168 = vadd.f32 %v1161, %v1167
        %v1169 = vadd.f32 %v1162, %v1167
        %1170 = vst.msk [vmem:[%s409] sm:$0xff] %vm430, %v1168
        %1171 = vst.msk [vmem:[%s409 + $0x8] sm:$0xff] %vm430, %v1169
        %s1172 = scalar_lea.vmem %s7, 16
        %v1173 = vld [vmem:[%s1172] sm:$0xf]
        %v1174 = vld [vmem:[%s1172 + $0x4] sm:$0xf]
        %v1175 = vld [vmem:[%s1172 + $0x8] sm:$0xf]
        %v1176 = vld [vmem:[%s1172 + $0xc] sm:$0xf]
        %v1177 = vld [vmem:[%s9 + $0x1] sm:$0x1]
        %v1178 = vlaneseq
        %v1179 = vshrl.u32 %v1178, 7
        %v1180 = vsub.s32 0, %v1179
        %v1181 = vrot.slane %v1177, %v1180
        %v1186 = vunpack.c.l.b16 %v1173
        %v1187 = vunpack.c.l.b16 %v1174
        %v1188 = vunpack.c.l.b16 %v1175
        %v1189 = vunpack.c.l.b16 %v1176
        %v1190 = vpack.c.b16 %v1187, %v1186
        %v1191 = vpack.c.b16 %v1189, %v1188
        %1194 = vmatprep.subr.bf16.mxu0 0
        %1195 = vmatpush1.bf16.msra.mxu0 %v1190
        %1196 = vmatprep.subr.bf16.mxu0 0
        %1197 = vmatpush1.bf16.msra.mxu0 %v1191
        %1198 = vmatprep.subr.bf16.mxu0 0
        %1199 = vmatpush1.bf16.msra.mxu0 0
        %1200 = vmatprep.subr.bf16.mxu0 0
        %1201 = vmatpush1.bf16.msra.mxu0 0
        %1202 = vmatprep.subr.bf16.mxu0 0
        %1203 = vmatpush1.bf16.msra.mxu0 0
        %1204 = vmatprep.subr.bf16.mxu0 0
        %1205 = vmatpush1.bf16.msra.mxu0 0
        %1206 = vmatprep.subr.bf16.mxu0 0
        %1207 = vmatpush1.bf16.msra.mxu0 0
        %1208 = vmatprep.subr.bf16.mxu0 0
        %1209 = vmatpush1.bf16.msra.mxu0 0
        %1210 = vmatprep.subr.bf16.mxu0 0
        %1211 = vmatpush1.bf16.msra.mxu0 0
        %1212 = vmatprep.subr.bf16.mxu0 0
        %1213 = vmatpush1.bf16.msra.mxu0 0
        %1214 = vmatprep.subr.bf16.mxu0 0
        %1215 = vmatpush1.bf16.msra.mxu0 0
        %1216 = vmatprep.subr.bf16.mxu0 0
        %1217 = vmatpush1.bf16.msra.mxu0 0
        %1218 = vmatprep.subr.bf16.mxu0 0
        %1219 = vmatpush1.bf16.msra.mxu0 0
        %1220 = vmatprep.subr.bf16.mxu0 0
        %1221 = vmatpush1.bf16.msra.mxu0 0
        %1222 = vmatprep.subr.bf16.mxu0 0
        %1223 = vmatpush1.bf16.msra.mxu0 0
        %1224 = vmatprep.subr.bf16.mxu0 0
        %1225 = vmatpush1.bf16.msra.mxu0 0
        %1226 = vmatprep.mubr.bf16.mxu0 0
        %1227 = vmatmul.mubr.bf16.gmra.mrb[0].mxu0 %v1116
        %v1228 = vpop.f32.mrb[0].mxu0
        %v1229 = vadd.f32 %v1181, %v1228
        %v1230 = vpop.f32.mrb[0].mxu0
        %v1231 = vpop.f32.mrb[0].mxu0
        %v1232 = vadd.f32 %v1181, %v1231
        %v1233 = vpop.f32.mrb[0].mxu0
        %1234 = vdwg.mxu0
        %v1235 = vld [vmem:[#allocation2 + $0x8] sm:$0xff]
        %v1236 = vld [vmem:[#allocation2 + $0x10] sm:$0xff]
        %v1237 = vadd.f32 %v1235, %v1229
        %v1238 = vadd.f32 %v1236, %v1232
        %v1239 = vmul.f32 %v1237, %v841
        %v1240 = vmul.f32 %v1238, %v846
        %1241 = vst.msk [vmem:[#allocation2 + $0x8] sm:$0xff] %vm430, %v1239
        %1242 = vst.msk [vmem:[#allocation2 + $0x10] sm:$0xff] %vm430, %v1240
        %v1243 = vld [vmem:[#allocation2 + $0x4] sm:$0xff]
        %v1244 = vld [vmem:[#allocation2 + $0xc] sm:$0xff]
        %v1245 = vpack.c.bf16 %v1244, %v1243
        %v1246 = vld [vmem:[#allocation2 + $0x8] sm:$0xff]
        %v1247 = vld [vmem:[#allocation2 + $0x10] sm:$0xff]
        %v1248 = vpack.c.bf16 %v1247, %v1246
        %v1249 = vld [vmem:[#allocation2 + $0x14] sm:$0xff]
        %v1250 = vpack.c.bf16 %v1249, %v1244
        %1252 = vrot.lane.b32.xlu0 %v1248, 32
        %v1253 = vpop.permute.xlu0 %1252
        %1255 = vrot.lane.b32.xlu0 %v1250, 64
        %v1256 = vpop.permute.xlu0 %1255
        %v1259 = vsel %vm430, %v1245, %v1253
        %v1261 = vsel %vm469, %v1259, %v1256
        %v1262 = vsel %vm472, %v1261, %v465
        %s1263 = scalar_lea.vmem %s3, 112
        %v1264 = vld [vmem:[%s1263] sm:$0xf]
        %v1265 = vld [vmem:[%s1263 + $0x4] sm:$0xf]
        %v1266 = vld [vmem:[%s1263 + $0x8] sm:$0xf]
        %v1267 = vld [vmem:[%s1263 + $0xc] sm:$0xf]
        %v1268 = vld [vmem:[%s1263 + $0x10] sm:$0xf]
        %v1269 = vld [vmem:[%s1263 + $0x14] sm:$0xf]
        %v1270 = vld [vmem:[%s1263 + $0x18] sm:$0xf]
        %v1271 = vld [vmem:[%s1263 + $0x1c] sm:$0xf]
        %v1272 = vld [vmem:[%s1263 + $0x20] sm:$0xf]
        %v1273 = vld [vmem:[%s1263 + $0x24] sm:$0xf]
        %v1274 = vld [vmem:[%s1263 + $0x28] sm:$0xf]
        %v1275 = vld [vmem:[%s1263 + $0x2c] sm:$0xf]
        %v1276 = vld [vmem:[%s1263 + $0x30] sm:$0xf]
        %v1277 = vld [vmem:[%s1263 + $0x34] sm:$0xf]
        %s1278 = scalar_lea.vmem %s4, 112
        %v1279 = vld [vmem:[%s1278] sm:$0xf]
        %v1280 = vld [vmem:[%s1278 + $0x4] sm:$0xf]
        %v1281 = vld [vmem:[%s1278 + $0x8] sm:$0xf]
        %v1282 = vld [vmem:[%s1278 + $0xc] sm:$0xf]
        %v1283 = vld [vmem:[%s1278 + $0x10] sm:$0xf]
        %v1284 = vld [vmem:[%s1278 + $0x14] sm:$0xf]
        %v1285 = vld [vmem:[%s1278 + $0x18] sm:$0xf]
        %v1286 = vld [vmem:[%s1278 + $0x1c] sm:$0xf]
        %v1287 = vld [vmem:[%s1278 + $0x20] sm:$0xf]
        %v1288 = vld [vmem:[%s1278 + $0x24] sm:$0xf]
        %v1289 = vld [vmem:[%s1278 + $0x28] sm:$0xf]
        %v1290 = vld [vmem:[%s1278 + $0x2c] sm:$0xf]
        %v1291 = vld [vmem:[%s1278 + $0x30] sm:$0xf]
        %v1292 = vld [vmem:[%s1278 + $0x34] sm:$0xf]
        %v1293 = vld [vmem:[%s5 + $0x2] sm:$0x1]
        %v1294 = vlaneseq
        %v1295 = vshrl.u32 %v1294, 7
        %v1296 = vsub.s32 0, %v1295
        %v1297 = vrot.slane %v1293, %v1296
        %v1312 = vunpack.c.l.b16 %v1264
        %v1313 = vunpack.c.l.b16 %v1265
        %v1314 = vunpack.c.l.b16 %v1266
        %v1315 = vunpack.c.l.b16 %v1267
        %v1316 = vunpack.c.l.b16 %v1268
        %v1317 = vunpack.c.l.b16 %v1269
        %v1318 = vunpack.c.l.b16 %v1270
        %v1319 = vunpack.c.l.b16 %v1271
        %v1320 = vunpack.c.l.b16 %v1272
        %v1321 = vunpack.c.l.b16 %v1273
        %v1322 = vunpack.c.l.b16 %v1274
        %v1323 = vunpack.c.l.b16 %v1275
        %v1324 = vunpack.c.l.b16 %v1276
        %v1325 = vunpack.c.l.b16 %v1277
        %v1326 = vpack.c.b16 %v1313, %v1312
        %v1327 = vpack.c.b16 %v1315, %v1314
        %v1328 = vpack.c.b16 %v1317, %v1316
        %v1329 = vpack.c.b16 %v1319, %v1318
        %v1330 = vpack.c.b16 %v1321, %v1320
        %v1331 = vpack.c.b16 %v1323, %v1322
        %v1332 = vpack.c.b16 %v1325, %v1324
        %v1340 = vsel %vm550, %v1262, 0
        %1342 = vmatprep.subr.bf16.mxu0 0
        %1343 = vmatpush1.bf16.msra.mxu0 %v1326
        %1344 = vmatprep.subr.bf16.mxu0 0
        %1345 = vmatpush1.bf16.msra.mxu0 %v1327
        %1346 = vmatprep.subr.bf16.mxu0 0
        %1347 = vmatpush1.bf16.msra.mxu0 %v1328
        %1348 = vmatprep.subr.bf16.mxu0 0
        %1349 = vmatpush1.bf16.msra.mxu0 %v1329
        %1350 = vmatprep.subr.bf16.mxu0 0
        %1351 = vmatpush1.bf16.msra.mxu0 %v1330
        %1352 = vmatprep.subr.bf16.mxu0 0
        %1353 = vmatpush1.bf16.msra.mxu0 %v1331
        %1354 = vmatprep.subr.bf16.mxu0 0
        %1355 = vmatpush1.bf16.msra.mxu0 %v1332
        %1356 = vmatprep.subr.bf16.mxu0 0
        %1357 = vmatpush1.bf16.msra.mxu0 0
        %1358 = vmatprep.subr.bf16.mxu0 0
        %1359 = vmatpush1.bf16.msra.mxu0 0
        %1360 = vmatprep.subr.bf16.mxu0 0
        %1361 = vmatpush1.bf16.msra.mxu0 0
        %1362 = vmatprep.subr.bf16.mxu0 0
        %1363 = vmatpush1.bf16.msra.mxu0 0
        %1364 = vmatprep.subr.bf16.mxu0 0
        %1365 = vmatpush1.bf16.msra.mxu0 0
        %1366 = vmatprep.subr.bf16.mxu0 0
        %1367 = vmatpush1.bf16.msra.mxu0 0
        %1368 = vmatprep.subr.bf16.mxu0 0
        %1369 = vmatpush1.bf16.msra.mxu0 0
        %1370 = vmatprep.subr.bf16.mxu0 0
        %1371 = vmatpush1.bf16.msra.mxu0 0
        %1372 = vmatprep.subr.bf16.mxu0 0
        %1373 = vmatpush1.bf16.msra.mxu0 0
        %1374 = vmatprep.mubr.bf16.mxu0 0
        %1375 = vmatmul.mubr.bf16.gmra.mrb[0].mxu0 %v1340
        %v1376 = vpop.f32.mrb[0].mxu0
        %v1377 = vadd.f32 %v1297, %v1376
        %v1378 = vpop.f32.mrb[0].mxu0
        %v1379 = vpop.f32.mrb[0].mxu0
        %v1380 = vadd.f32 %v1297, %v1379
        %v1381 = vpop.f32.mrb[0].mxu0
        %1382 = vdwg.mxu0
        %v1383 = vld [vmem:[%s6 + $0x2] sm:$0x1]
        %v1384 = vlaneseq
        %v1385 = vshrl.u32 %v1384, 7
        %v1386 = vsub.s32 0, %v1385
        %v1387 = vrot.slane %v1383, %v1386
        %v1402 = vunpack.c.l.b16 %v1279
        %v1403 = vunpack.c.l.b16 %v1280
        %v1404 = vunpack.c.l.b16 %v1281
        %v1405 = vunpack.c.l.b16 %v1282
        %v1406 = vunpack.c.l.b16 %v1283
        %v1407 = vunpack.c.l.b16 %v1284
        %v1408 = vunpack.c.l.b16 %v1285
        %v1409 = vunpack.c.l.b16 %v1286
        %v1410 = vunpack.c.l.b16 %v1287
        %v1411 = vunpack.c.l.b16 %v1288
        %v1412 = vunpack.c.l.b16 %v1289
        %v1413 = vunpack.c.l.b16 %v1290
        %v1414 = vunpack.c.l.b16 %v1291
        %v1415 = vunpack.c.l.b16 %v1292
        %v1416 = vpack.c.b16 %v1403, %v1402
        %v1417 = vpack.c.b16 %v1405, %v1404
        %v1418 = vpack.c.b16 %v1407, %v1406
        %v1419 = vpack.c.b16 %v1409, %v1408
        %v1420 = vpack.c.b16 %v1411, %v1410
        %v1421 = vpack.c.b16 %v1413, %v1412
        %v1422 = vpack.c.b16 %v1415, %v1414
        %1430 = vmatprep.subr.bf16.mxu0 0
        %1431 = vmatpush1.bf16.msra.mxu0 %v1416
        %1432 = vmatprep.subr.bf16.mxu0 0
        %1433 = vmatpush1.bf16.msra.mxu0 %v1417
        %1434 = vmatprep.subr.bf16.mxu0 0
        %1435 = vmatpush1.bf16.msra.mxu0 %v1418
        %1436 = vmatprep.subr.bf16.mxu0 0
        %1437 = vmatpush1.bf16.msra.mxu0 %v1419
        %1438 = vmatprep.subr.bf16.mxu0 0
        %1439 = vmatpush1.bf16.msra.mxu0 %v1420
        %1440 = vmatprep.subr.bf16.mxu0 0
        %1441 = vmatpush1.bf16.msra.mxu0 %v1421
        %1442 = vmatprep.subr.bf16.mxu0 0
        %1443 = vmatpush1.bf16.msra.mxu0 %v1422
        %1444 = vmatprep.subr.bf16.mxu0 0
        %1445 = vmatpush1.bf16.msra.mxu0 0
        %1446 = vmatprep.subr.bf16.mxu0 0
        %1447 = vmatpush1.bf16.msra.mxu0 0
        %1448 = vmatprep.subr.bf16.mxu0 0
        %1449 = vmatpush1.bf16.msra.mxu0 0
        %1450 = vmatprep.subr.bf16.mxu0 0
        %1451 = vmatpush1.bf16.msra.mxu0 0
        %1452 = vmatprep.subr.bf16.mxu0 0
        %1453 = vmatpush1.bf16.msra.mxu0 0
        %1454 = vmatprep.subr.bf16.mxu0 0
        %1455 = vmatpush1.bf16.msra.mxu0 0
        %1456 = vmatprep.subr.bf16.mxu0 0
        %1457 = vmatpush1.bf16.msra.mxu0 0
        %1458 = vmatprep.subr.bf16.mxu0 0
        %1459 = vmatpush1.bf16.msra.mxu0 0
        %1460 = vmatprep.subr.bf16.mxu0 0
        %1461 = vmatpush1.bf16.msra.mxu0 0
        %1462 = vmatprep.mubr.bf16.mxu0 0
        %1463 = vmatmul.mubr.bf16.gmra.mrb[0].mxu0 %v1340
        %v1464 = vpop.f32.mrb[0].mxu0
        %v1465 = vadd.f32 %v1387, %v1464
        %v1466 = vpop.f32.mrb[0].mxu0
        %v1467 = vpop.f32.mrb[0].mxu0
        %v1468 = vadd.f32 %v1387, %v1467
        %v1469 = vpop.f32.mrb[0].mxu0
        %1470 = vdwg.mxu0
        %v1471 = vtanh.pop %v1377
        %v1472 = vtanh.pop %v1380
        %v1473 = vxor.u32 %v1465, 2147483648
        %v1474 = vxor.u32 %v1468, 2147483648
        %v1475 = vmul.f32 %v1473, 1.442695
        %v1476 = vpow.pop %v1475
        %v1477 = vmul.f32 %v1474, 1.442695
        %v1478 = vpow.pop %v1477
        %v1479 = vadd.f32 %v1476, 1.0
        %v1480 = vadd.f32 %v1478, 1.0
        %v1481 = vrcp.pop %v1479
        %v1482 = vmul.f32 1.0, %v1481
        %v1483 = vrcp.pop %v1480
        %v1484 = vmul.f32 1.0, %v1483
        %v1485 = vmul.f32 %v1471, %v1482
        %v1486 = vmul.f32 %v1472, %v1484
        %v1487 = vpack.c.bf16 %v1486, %v1485
        %s1488 = scalar_lea.vmem %s8, 32
        %v1489 = vld [vmem:[%s1488] sm:$0xf]
        %v1490 = vld [vmem:[%s1488 + $0x4] sm:$0xf]
        %v1491 = vld [vmem:[%s1488 + $0x8] sm:$0xf]
        %v1492 = vld [vmem:[%s1488 + $0xc] sm:$0xf]
        %v1497 = vunpack.c.l.b16 %v1489
        %v1498 = vunpack.c.l.b16 %v1490
        %v1499 = vunpack.c.l.b16 %v1491
        %v1500 = vunpack.c.l.b16 %v1492
        %v1501 = vpack.c.b16 %v1498, %v1497
        %v1502 = vpack.c.b16 %v1500, %v1499
        %v1506 = vsel %vm430, %v1487, 0
        %1508 = vmatprep.subr.bf16.mxu0 0
        %1509 = vmatpush1.bf16.msra.mxu0 %v1501
        %1510 = vmatprep.subr.bf16.mxu0 0
        %1511 = vmatpush1.bf16.msra.mxu0 %v1502
        %1512 = vmatprep.subr.bf16.mxu0 0
        %1513 = vmatpush1.bf16.msra.mxu0 0
        %1514 = vmatprep.subr.bf16.mxu0 0
        %1515 = vmatpush1.bf16.msra.mxu0 0
        %1516 = vmatprep.subr.bf16.mxu0 0
        %1517 = vmatpush1.bf16.msra.mxu0 0
        %1518 = vmatprep.subr.bf16.mxu0 0
        %1519 = vmatpush1.bf16.msra.mxu0 0
        %1520 = vmatprep.subr.bf16.mxu0 0
        %1521 = vmatpush1.bf16.msra.mxu0 0
        %1522 = vmatprep.subr.bf16.mxu0 0
        %1523 = vmatpush1.bf16.msra.mxu0 0
        %1524 = vmatprep.subr.bf16.mxu0 0
        %1525 = vmatpush1.bf16.msra.mxu0 0
        %1526 = vmatprep.subr.bf16.mxu0 0
        %1527 = vmatpush1.bf16.msra.mxu0 0
        %1528 = vmatprep.subr.bf16.mxu0 0
        %1529 = vmatpush1.bf16.msra.mxu0 0
        %1530 = vmatprep.subr.bf16.mxu0 0
        %1531 = vmatpush1.bf16.msra.mxu0 0
        %1532 = vmatprep.subr.bf16.mxu0 0
        %1533 = vmatpush1.bf16.msra.mxu0 0
        %1534 = vmatprep.subr.bf16.mxu0 0
        %1535 = vmatpush1.bf16.msra.mxu0 0
        %1536 = vmatprep.subr.bf16.mxu0 0
        %1537 = vmatpush1.bf16.msra.mxu0 0
        %1538 = vmatprep.subr.bf16.mxu0 0
        %1539 = vmatpush1.bf16.msra.mxu0 0
        %1540 = vmatprep.mubr.bf16.mxu0 0
        %1541 = vmatmul.mubr.bf16.gmra.mrb[0].mxu0 %v1506
        %v1542 = vpop.f32.mrb[0].mxu0
        %v1543 = vadd.f32 0.0, %v1542
        %v1544 = vpop.f32.mrb[0].mxu0
        %v1545 = vpop.f32.mrb[0].mxu0
        %v1546 = vadd.f32 0.0, %v1545
        %v1547 = vpop.f32.mrb[0].mxu0
        %1548 = vdwg.mxu0
        %v1549 = vld [vmem:[%s409] sm:$0xff]
        %v1550 = vld [vmem:[%s409 + $0x8] sm:$0xff]
        %v1551 = vadd.f32 %v1549, %v1543
        %v1552 = vadd.f32 %v1550, %v1546
        %v1553 = vld [vmem:[%s10 + $0x2] sm:$0x1]
        %v1554 = vlaneseq
        %v1555 = vshrl.u32 %v1554, 7
        %v1556 = vsub.s32 0, %v1555
        %v1557 = vrot.slane %v1553, %v1556
        %v1558 = vadd.f32 %v1551, %v1557
        %v1559 = vadd.f32 %v1552, %v1557
        %1560 = vst.msk [vmem:[%s409] sm:$0xff] %vm430, %v1558
        %1561 = vst.msk [vmem:[%s409 + $0x8] sm:$0xff] %vm430, %v1559
        %v1562 = vld [vmem:[%s409] sm:$0xff]
        %v1563 = vld [vmem:[%s409 + $0x8] sm:$0xff]
        %v1564 = vmul.f32 %v1562, %v841
        %v1565 = vmul.f32 %v1563, %v846
        %1566 = vst.msk [vmem:[%s409] sm:$0xff] %vm430, %v1564
        %1567 = vst.msk [vmem:[%s409 + $0x8] sm:$0xff] %vm430, %v1565
        %s1568 = sand.u32 %s279, 1
        %s1569 = scalar_lea.sflag [#allocation4], %s1568
        %s1570 = sand.u32 %s279, 1
        %s1571 = smul.addr %s1570, 16
        %s1572 = scalar_lea.vmem [#allocation3], %s1571
        // Predicated region
        $region65: #{tpu_custom_call.1} parent=63 // pred_check
          %p1573 = pneg %p289
        $region66: #{tpu_custom_call.1} parent=63 // pred_check_branch
          %1575 = sbr.rel (%p1573) target = $region68
        $region67: #{tpu_custom_call.1} parent=63 // pred_region
          %s1577 = ssub.s32 256, 256
          %1578 = vsyncadd %s1569, %s1577
          %s1579 = smul.addr %s25, 2
          %s1580 = smul.addr %s1579, 128
          %s1581 = scalar_lea.hbm %s11, %s1580
          %s1582 = sshll.u32 %s1572, 4
          %s1583 = int_to_ptr.vmem [resolvable:$true] %s1582
          %1588 = dma.vmem_to_hbm [thread:$0]  %s1583, 256, %s1581, %s1569, 128, 128, 8
        $region68: #{tpu_custom_call.1} parent=63 // pred_fallthru
          _
      $region64: #{tpu_custom_call.1} parent=5 // pred_fallthru
        _
      %p1589 = scmp.le.s32.totalorder 2, %s20
      // Predicated region
      $region69: #{tpu_custom_call.1} parent=5 // pred_check
        %p1590 = pneg %p1589
      $region70: #{tpu_custom_call.1} parent=5 // pred_check_branch
        %1592 = sbr.rel (%p1590) target = $region72
      $region71: #{tpu_custom_call.1} parent=5 // pred_region
        %s1593 = ssub.s32 %s20, 2
        // Predicated region
        $region73: #{tpu_custom_call.1} parent=71 // pred_check
          %p1594 = pneg %p295
        $region74: #{tpu_custom_call.1} parent=71 // pred_check_branch
          %1596 = sbr.rel (%p1594) target = $region76
        $region75: #{tpu_custom_call.1} parent=71 // pred_region
          %s1597 = sand.u32 %s280, 1
          %s1598 = scalar_lea.sflag [#allocation4], %s1597
          %s1599 = sand.u32 %s280, 1
          %s1600 = smul.addr %s1599, 16
          %s1601 = scalar_lea.vmem [#allocation3], %s1600
          %1602 = dma.done %s1598, 256
        $region76: #{tpu_custom_call.1} parent=71 // pred_fallthru
          _
      $region72: #{tpu_custom_call.1} parent=5 // pred_fallthru
        _
    $region6: #{tpu_custom_call.1} parent=1 // loop_footer
      %s24 = sadd.s32 1, %s20
    $region7: #{tpu_custom_call.1} parent=1 // loop_footer_branch
      %19 = sbr.rel target = $region3
    $region8: #{tpu_custom_call.1} parent=1 // loop_exit
      _
    %1603 = vsyncpa [#allocation4], 1
    %s1604 = scalar_lea.sflag [#allocation4], 1
    %1605 = vsyncpa %s1604, 1

</llo_original>
